<compile_context>
chip_gen: v7x
topology: tpu7x:2x2x1
jax: 0.10.0
libtpu: 0.0.40
codegen_flags: <defaults>
</compile_context>

<pallas_src>
import functools

import numpy as np
import jax
import jax.numpy as jnp
from jax.experimental import pallas as pl
from jax.experimental.pallas import tpu as pltpu


# ----------------------------- parameter setup ------------------------------

def make_sketch_matrix(rand_h, rand_s, output_dim):
    """Dense count-sketch projection matrix [input_dim, output_dim] (float64)."""
    input_dim = len(rand_h)
    w = np.zeros((input_dim, output_dim), dtype=np.float64)
    w[np.arange(input_dim), rand_h.astype(np.int64)] = rand_s.astype(np.float64)
    return w


def make_cbp_params(input_dim1, input_dim2, output_dim):
    """Mirrors CompactBilinearPooling.__init__ seeding, folds the sketch
    matrices into the forward DFT offline, and packs everything into two
    matmul-ready weights for the kernel."""
    np.random.seed(1)
    rand_h_1 = np.random.randint(output_dim, size=input_dim1)
    np.random.seed(3)
    rand_s_1 = 2 * np.random.randint(2, size=input_dim1) - 1
    np.random.seed(5)
    rand_h_2 = np.random.randint(output_dim, size=input_dim2)
    np.random.seed(7)
    rand_s_2 = 2 * np.random.randint(2, size=input_dim2) - 1

    w1 = make_sketch_matrix(rand_h_1, rand_s_1, output_dim)   # [C1, D]
    w2 = make_sketch_matrix(rand_h_2, rand_s_2, output_dim)   # [C2, D]

    # Forward DFT:  X[m] = sum_k x[k] * exp(-2*pi*i*k*m/D)
    # Inverse DFT:  x[n] = (1/D) * sum_m X[m] * exp(+2*pi*i*m*n/D)
    k = np.arange(output_dim, dtype=np.float64)
    ang = 2.0 * np.pi * np.outer(k, k) / output_dim
    dft_r = np.cos(ang)                   # Re(exp(-i*ang))
    dft_i = -np.sin(ang)                  # Im(exp(-i*ang))
    idft_r = np.cos(ang) / output_dim     # Re(exp(+i*ang)) / D
    idft_i = np.sin(ang) / output_dim     # Im(exp(+i*ang)) / D

    C1, C2, D = input_dim1, input_dim2, output_dim

    # Fold count-sketch into the DFT offline (exact in f64), then pack into a
    # single block-diagonal forward weight so the kernel does ONE matmul:
    #   [b1 | b2] @ wfwd = [x1r | x1i | x2r | x2i]   with wfwd: [C1+C2, 4D].
    w1ri = np.concatenate([w1 @ dft_r, w1 @ dft_i], axis=1)   # [C1, 2D]
    w2ri = np.concatenate([w2 @ dft_r, w2 @ dft_i], axis=1)   # [C2, 2D]
    wfwd = np.zeros((C1 + C2, 4 * D), dtype=np.float64)
    wfwd[:C1, : 2 * D] = w1ri
    wfwd[C1:, 2 * D:] = w2ri

    # Fused real inverse DFT:  out = ppr @ idft_r - ppi @ idft_i
    #                              = [ppr | ppi] @ vstack([idft_r, -idft_i]).
    widft = np.concatenate([idft_r, -idft_i], axis=0)          # [2D, D]

    kernel_params = (jnp.asarray(wfwd.astype(np.float32)),
                     jnp.asarray(widft.astype(np.float32)))
    # Plain sketch matrices for the pure-JAX FFT reference.
    ref_params = (jnp.asarray(w1.astype(np.float32)),
                  jnp.asarray(w2.astype(np.float32)))
    return kernel_params, ref_params


# -------------------------------- the kernel --------------------------------

def cbp_kernel(b_ref, wfwd_ref, widft_ref, out_ref, *, tb, hw, d):
    f32 = jnp.float32

    # ONE block-diagonal sketch+DFT matmul: [rows, C1+C2] @ [C1+C2, 4D].
    x = jnp.dot(b_ref[...], wfwd_ref[...], preferred_element_type=f32)
    # Static slices at 128-lane-aligned boundaries.
    x1r = x[:, :d]
    x1i = x[:, d:2 * d]
    x2r = x[:, 2 * d:3 * d]
    x2i = x[:, 3 * d:]

    # Complex elementwise product in the frequency domain (per spatial pos).
    pr = x1r * x2r - x1i * x2i                                  # [rows, D]
    pi = x1r * x2i + x1i * x2r                                  # [rows, D]

    # Spatial sum-pool (over H*W per batch element) BEFORE the inverse DFT —
    # legal by linearity; sublane-group reduce instead of a matmul.
    ppr = jnp.sum(pr.reshape(tb, hw, d), axis=1)                # [TB, D]
    ppi = jnp.sum(pi.reshape(tb, hw, d), axis=1)                # [TB, D]
    pp = jnp.concatenate([ppr, ppi], axis=-1)                   # [TB, 2D]

    # Fused real inverse DFT: [ppr | ppi] @ vstack([idft_r, -idft_i]).
    out_ref[...] = jnp.dot(pp, widft_ref[...], preferred_element_type=f32)


def _round_up(x, m):
    return ((x + m - 1) // m) * m


def compact_bilinear_pooling_forward(bottom1, bottom2, params, output_dim,
                                     batch_tile=32):
    """bottom1: [B, C1, H, W], bottom2: [B, C2, H, W] -> [B, output_dim]
    (sum_pool=True path of the PyTorch module)."""
    wfwd, widft = params
    B, C1, H, W = bottom1.shape
    C2 = bottom2.shape[1]
    HW = H * W
    D = output_dim

    # NCHW -> NHWC -> [B*H*W, C]; concat channels into ONE activation array
    # (single per-step DMA, matches the block-diagonal forward weight).
    b1 = jnp.transpose(bottom1, (0, 2, 3, 1)).reshape(B * HW, C1)
    b2 = jnp.transpose(bottom2, (0, 2, 3, 1)).reshape(B * HW, C2)
    b = jnp.concatenate([b1, b2], axis=-1)                      # [B*HW, C1+C2]

    # Batch tile: large enough to amortize per-step overhead, but clamped so
    # tiny batches don't over-pad; always a multiple of 8 (sublane tile).
    TB = _round_up(min(batch_tile, _round_up(B, 8)), 8)
    B_pad = _round_up(B, TB)
    pad_rows = (B_pad - B) * HW
    if pad_rows:
        b = jnp.pad(b, ((0, pad_rows), (0, 0)))                 # zero rows
    rows = TB * HW

    grid = (B_pad // TB,)
    out = pl.pallas_call(
        functools.partial(cbp_kernel, tb=TB, hw=HW, d=D),
        out_shape=jax.ShapeDtypeStruct((B_pad, D), jnp.float32),
        grid=grid,
        in_specs=[
            pl.BlockSpec((rows, C1 + C2), lambda i: (i, 0)),     # activations
            pl.BlockSpec((C1 + C2, 4 * D), lambda i: (0, 0)),    # block-diag sketch+DFT
            pl.BlockSpec((2 * D, D), lambda i: (0, 0)),          # fused real iDFT
        ],
        out_specs=pl.BlockSpec((TB, D), lambda i: (i, 0)),
        compiler_params=pltpu.CompilerParams(
            dimension_semantics=("parallel",)),
    )(b, wfwd, widft)
    return out[:B]


# --------------------------- pure-JAX reference ------------------------------

def cbp_reference(bottom1, bottom2, w1, w2, output_dim):
    B, C1, H, W = bottom1.shape
    C2 = bottom2.shape[1]
    b1 = jnp.transpose(bottom1, (0, 2, 3, 1)).reshape(-1, C1)
    b2 = jnp.transpose(bottom2, (0, 2, 3, 1)).reshape(-1, C2)
    s1 = b1 @ w1
    s2 = b2 @ w2
    cbp_flat = jnp.real(jnp.fft.ifft(jnp.fft.fft(s1, axis=-1) *
                                     jnp.fft.fft(s2, axis=-1), axis=-1))
    cbp = cbp_flat.reshape(B, H, W, output_dim)
    return cbp.sum(axis=(1, 2))


# ----------------------------------- main ------------------------------------

if __name__ == "__main__":
    B, C1, C2, H, W = 2, 16, 8, 4, 4
    output_dim = 256

    kernel_params, (w1_ref, w2_ref) = make_cbp_params(C1, C2, output_dim)

    key = jax.random.PRNGKey(0)
    k1, k2 = jax.random.split(key)
    bottom1 = jax.random.normal(k1, (B, C1, H, W), dtype=jnp.float32)
    bottom2 = jax.random.normal(k2, (B, C2, H, W), dtype=jnp.float32)

    out = compact_bilinear_pooling_forward(bottom1, bottom2,
                                           kernel_params, output_dim)
    out = jax.block_until_ready(out)

    ref = cbp_reference(bottom1, bottom2, w1_ref, w2_ref, output_dim)
    np.testing.assert_allclose(np.asarray(out), np.asarray(ref),
                               rtol=2e-3, atol=1e-2)

    print("KERNEL_OK")
</pallas_src>

<mosaic_0001>
module attributes {stable_mosaic.version = 11 : i64} {
  func.func @cbp_kernel(%arg0: i32, %arg1: memref<128x24xf32, #tpu.memory_space<vmem>>, %arg2: memref<24x1024xf32, #tpu.memory_space<vmem>>, %arg3: memref<512x256xf32, #tpu.memory_space<vmem>>, %arg4: memref<8x256xf32, #tpu.memory_space<vmem>>) attributes {dimension_semantics = [#tpu.dimension_semantics<parallel>], iteration_bounds = array<i64: 1>, scalar_prefetch = 0 : i64, scratch_operands = 0 : i64, tpu.core_type = #tpu.core_type<tc>, window_params = [{transform_indices = @transform_0, window_bounds = array<i64: 128, 24>}, {pipeline_mode = #tpu.pipeline_mode<synchronous>, transform_indices = @transform_1, window_bounds = array<i64: 24, 1024>}, {pipeline_mode = #tpu.pipeline_mode<synchronous>, transform_indices = @transform_2, window_bounds = array<i64: 512, 256>}, {transform_indices = @transform_3, window_bounds = array<i64: 8, 256>}]} {
    %c0 = arith.constant 0 : index
    %c0_0 = arith.constant 0 : index
    %0 = vector.load %arg1[%c0, %c0_0] : memref<128x24xf32, #tpu.memory_space<vmem>>, vector<128x24xf32>
    %c0_1 = arith.constant 0 : index
    %c0_2 = arith.constant 0 : index
    %1 = vector.load %arg2[%c0_1, %c0_2] : memref<24x1024xf32, #tpu.memory_space<vmem>>, vector<24x1024xf32>
    %cst = arith.constant dense<0.000000e+00> : vector<128x1024xf32>
    %2 = tpu.matmul %0, %1, %cst {dimension_numbers = #tpu.dot_dimension_numbers<[1], [0], [0], [1], [0, 0, 1, 1], [], []>} : vector<128x24xf32>, vector<24x1024xf32>, vector<128x1024xf32> -> vector<128x1024xf32>
    %3 = vector.extract_strided_slice %2 {offsets = [0, 0], sizes = [128, 256], strides = [1, 1]} : vector<128x1024xf32> to vector<128x256xf32>
    %4 = vector.extract_strided_slice %2 {offsets = [0, 256], sizes = [128, 256], strides = [1, 1]} : vector<128x1024xf32> to vector<128x256xf32>
    %5 = vector.extract_strided_slice %2 {offsets = [0, 512], sizes = [128, 256], strides = [1, 1]} : vector<128x1024xf32> to vector<128x256xf32>
    %6 = vector.extract_strided_slice %2 {offsets = [0, 768], sizes = [128, 256], strides = [1, 1]} : vector<128x1024xf32> to vector<128x256xf32>
    %7 = arith.mulf %3, %5 : vector<128x256xf32>
    %8 = arith.mulf %4, %6 : vector<128x256xf32>
    %9 = arith.subf %7, %8 : vector<128x256xf32>
    %10 = arith.mulf %3, %6 : vector<128x256xf32>
    %11 = arith.mulf %4, %5 : vector<128x256xf32>
    %12 = arith.addf %10, %11 : vector<128x256xf32>
    %13 = vector.shape_cast %9 : vector<128x256xf32> to vector<8x16x256xf32>
    %cst_3 = arith.constant dense<0.000000e+00> : vector<8x256xf32>
    %14 = vector.multi_reduction <add>, %13, %cst_3 [1] : vector<8x16x256xf32> to vector<8x256xf32>
    %15 = vector.shape_cast %12 : vector<128x256xf32> to vector<8x16x256xf32>
    %cst_4 = arith.constant dense<0.000000e+00> : vector<8x256xf32>
    %16 = vector.multi_reduction <add>, %15, %cst_4 [1] : vector<8x16x256xf32> to vector<8x256xf32>
    %17 = tpu.concatenate %14, %16 in 1 : vector<8x256xf32>, vector<8x256xf32> -> vector<8x512xf32>
    %c0_5 = arith.constant 0 : index
    %c0_6 = arith.constant 0 : index
    %18 = vector.load %arg3[%c0_5, %c0_6] : memref<512x256xf32, #tpu.memory_space<vmem>>, vector<512x256xf32>
    %cst_7 = arith.constant dense<0.000000e+00> : vector<8x256xf32>
    %19 = tpu.matmul %17, %18, %cst_7 {dimension_numbers = #tpu.dot_dimension_numbers<[1], [0], [0], [1], [0, 0, 1, 1], [], []>} : vector<8x512xf32>, vector<512x256xf32>, vector<8x256xf32> -> vector<8x256xf32>
    %c0_8 = arith.constant 0 : index
    %c0_9 = arith.constant 0 : index
    %20 = vector.load %arg4[%c0_8, %c0_9] : memref<8x256xf32, #tpu.memory_space<vmem>>, vector<8x256xf32>
    tpu.vector_store %arg4[%c0_8, %c0_9], %19 {strides = array<i32>} : memref<8x256xf32, #tpu.memory_space<vmem>>, vector<8x256xf32>,
    return
  }
  func.func @transform_0(%arg0: i32) -> (i32, i32) {
    %c0_i32 = arith.constant 0 : i32
    %c0_i32_0 = arith.constant 0 : i32
    return %arg0, %c0_i32 : i32, i32
  }
  func.func @transform_1(%arg0: i32) -> (i32, i32) {
    %c0_i32 = arith.constant 0 : i32
    %c0_i32_0 = arith.constant 0 : i32
    %c0_i32_1 = arith.constant 0 : i32
    return %c0_i32, %c0_i32_0 : i32, i32
  }
  func.func @transform_2(%arg0: i32) -> (i32, i32) {
    %c0_i32 = arith.constant 0 : i32
    %c0_i32_0 = arith.constant 0 : i32
    %c0_i32_1 = arith.constant 0 : i32
    return %c0_i32, %c0_i32_0 : i32, i32
  }
  func.func @transform_3(%arg0: i32) -> (i32, i32) {
    %c0_i32 = arith.constant 0 : i32
    %c0_i32_0 = arith.constant 0 : i32
    return %arg0, %c0_i32 : i32, i32
  }
}

</mosaic_0001>

<llo_original>
// kernel: tpu_custom_call.1
$region0: #{tpu_custom_call.1}
  #allocation0 [shape = 'u32[]', space=smem, size = 0x4, offset = 0x4, fixed_abs, tag = 'smem constant byte address 0x4 - core index']
  #allocation1 [shape = 'u32[144,128]{1,0:T(1,128)}', space=vmem, size = 0x12000, scoped, tag = 'internal scratch']
  %s0 = inlined_call_operand.vmem [shape: f32[128,24], index: 0, kind: input, shape index: {}]
  %s1 = inlined_call_operand.hbm [shape: f32[24,1024], index: 1, kind: input, shape index: {}]
  %s2 = inlined_call_operand.hbm [shape: f32[512,256], index: 2, kind: input, shape index: {}]
  %s3 = inlined_call_operand.hbm [shape: f32[8,256], index: 3, kind: output, shape index: {}]
  %s4 = sld [smem:[#allocation0]]
  $region30: #{tpu_custom_call.1} parent=0
    _
  %s6 = ssub.s32 1, %s4
  %s7 = scalar_select 0, %s6, %s4
  $region1: #{tpu_custom_call.1} parent=0
    #allocation2 [shape = 'u8[98304]{0}', space=vmem, size = 0x18000, scoped, tag = 'input window, operand 1, single buffered']
    #allocation3 [shape = 's32[1]{0}', space=sflag, size = 0x4, scoped, tag = 'scoped memory for tpu_custom_call.1']
    #allocation4 [shape = 's32[1]{0}', space=sflag, size = 0x4, scoped, tag = 'scoped memory for tpu_custom_call.1']
    #allocation5 [shape = 'u8[524288]{0}', space=vmem, size = 0x80000, scoped, tag = 'input window, operand 2, single buffered']
    #allocation6 [shape = 's32[1]{0}', space=sflag, size = 0x4, scoped, tag = 'scoped memory for tpu_custom_call.1']
    #allocation7 [shape = 'u8[8192]{0}', space=vmem, size = 0x2000, scoped, tag = 'output window, operand 0, single buffered']
    %8 = vsyncpa [#allocation3], 0
    %9 = vsyncpa [#allocation6], 0
    %10 = vsyncpa [#allocation4], 0
    // Predicated region
    $region2: #{tpu_custom_call.1} parent=1 // pred_check
      _
    $region3: #{tpu_custom_call.1} parent=1 // pred_check_branch
      %12 = sbr.rel (0) target = $region5
    $region4: #{tpu_custom_call.1} parent=1 // pred_region
      _
    $region5: #{tpu_custom_call.1} parent=1 // pred_fallthru
      _
    // Predicated region
    $region6: #{tpu_custom_call.1} parent=1 // pred_check
      _
    $region7: #{tpu_custom_call.1} parent=1 // pred_check_branch
      %14 = sbr.rel (0) target = $region9
    $region8: #{tpu_custom_call.1} parent=1 // pred_region
      %s16 = ssub.s32 3072, 3072
      %17 = vsyncadd [#allocation3], %s16
      %s18 = sshll.u32 [#allocation2], 4
      %s19 = int_to_ptr.vmem [resolvable:$true] %s18
      %24 = dma.hbm_to_vmem [thread:$0]  %s1, 3072, %s19, [#allocation3], 1024, 1024, 64
    $region9: #{tpu_custom_call.1} parent=1 // pred_fallthru
      _
    // Predicated region
    $region10: #{tpu_custom_call.1} parent=1 // pred_check
      _
    $region11: #{tpu_custom_call.1} parent=1 // pred_check_branch
      %26 = sbr.rel (0) target = $region13
    $region12: #{tpu_custom_call.1} parent=1 // pred_region
      %s28 = ssub.s32 16384, 16384
      %29 = vsyncadd [#allocation6], %s28
      %s30 = sshll.u32 [#allocation5], 4
      %s31 = int_to_ptr.vmem [resolvable:$true] %s30
      %36 = dma.hbm_to_vmem [thread:$0]  %s2, 16384, %s31, [#allocation6], 256, 256, 16
    $region13: #{tpu_custom_call.1} parent=1 // pred_fallthru
      _
    // Predicated region
    $region14: #{tpu_custom_call.1} parent=1 // pred_check
      _
    $region15: #{tpu_custom_call.1} parent=1 // pred_check_branch
      %38 = sbr.rel (0) target = $region17
    $region16: #{tpu_custom_call.1} parent=1 // pred_region
      %39 = dma.done [#allocation3], 3072
    $region17: #{tpu_custom_call.1} parent=1 // pred_fallthru
      _
    // Predicated region
    $region18: #{tpu_custom_call.1} parent=1 // pred_check
      _
    $region19: #{tpu_custom_call.1} parent=1 // pred_check_branch
      %41 = sbr.rel (0) target = $region21
    $region20: #{tpu_custom_call.1} parent=1 // pred_region
      %42 = dma.done [#allocation6], 16384
    $region21: #{tpu_custom_call.1} parent=1 // pred_fallthru
      _
    %v43 = vld [vmem:[%s0] sm:$0xff]
    %v44 = vld [vmem:[%s0 + $0x8] sm:$0xff]
    %v45 = vld [vmem:[%s0 + $0x10] sm:$0xff]
    %v46 = vld [vmem:[%s0 + $0x18] sm:$0xff]
    %v47 = vld [vmem:[%s0 + $0x20] sm:$0xff]
    %v48 = vld [vmem:[%s0 + $0x28] sm:$0xff]
    %v49 = vld [vmem:[%s0 + $0x30] sm:$0xff]
    %v50 = vld [vmem:[%s0 + $0x38] sm:$0xff]
    %v51 = vld [vmem:[%s0 + $0x40] sm:$0xff]
    %v52 = vld [vmem:[%s0 + $0x48] sm:$0xff]
    %v53 = vld [vmem:[%s0 + $0x50] sm:$0xff]
    %v54 = vld [vmem:[%s0 + $0x58] sm:$0xff]
    %v55 = vld [vmem:[%s0 + $0x60] sm:$0xff]
    %v56 = vld [vmem:[%s0 + $0x68] sm:$0xff]
    %v57 = vld [vmem:[%s0 + $0x70] sm:$0xff]
    %v58 = vld [vmem:[%s0 + $0x78] sm:$0xff]
    %v59 = vld [vmem:[#allocation2] sm:$0xff]
    %v60 = vld [vmem:[#allocation2 + $0x8] sm:$0xff]
    %v61 = vld [vmem:[#allocation2 + $0x10] sm:$0xff]
    %v62 = vld [vmem:[#allocation2 + $0x18] sm:$0xff]
    %v63 = vld [vmem:[#allocation2 + $0x20] sm:$0xff]
    %v64 = vld [vmem:[#allocation2 + $0x28] sm:$0xff]
    %v65 = vld [vmem:[#allocation2 + $0x30] sm:$0xff]
    %v66 = vld [vmem:[#allocation2 + $0x38] sm:$0xff]
    %v67 = vld [vmem:[#allocation2 + $0x40] sm:$0xff]
    %v68 = vld [vmem:[#allocation2 + $0x48] sm:$0xff]
    %v69 = vld [vmem:[#allocation2 + $0x50] sm:$0xff]
    %v70 = vld [vmem:[#allocation2 + $0x58] sm:$0xff]
    %v71 = vld [vmem:[#allocation2 + $0x60] sm:$0xff]
    %v72 = vld [vmem:[#allocation2 + $0x68] sm:$0xff]
    %v73 = vld [vmem:[#allocation2 + $0x70] sm:$0xff]
    %v74 = vld [vmem:[#allocation2 + $0x78] sm:$0xff]
    %v75 = vld [vmem:[#allocation2 + $0x80] sm:$0xff]
    %v76 = vld [vmem:[#allocation2 + $0x88] sm:$0xff]
    %v77 = vld [vmem:[#allocation2 + $0x90] sm:$0xff]
    %v78 = vld [vmem:[#allocation2 + $0x98] sm:$0xff]
    %v79 = vld [vmem:[#allocation2 + $0xa0] sm:$0xff]
    %v80 = vld [vmem:[#allocation2 + $0xa8] sm:$0xff]
    %v81 = vld [vmem:[#allocation2 + $0xb0] sm:$0xff]
    %v82 = vld [vmem:[#allocation2 + $0xb8] sm:$0xff]
    %vm83 = vcmask 195584
    %v85 = vsel %vm83, %v43, 0
    %v88 = vsel %vm83, %v44, 0
    %v91 = vsel %vm83, %v45, 0
    %v94 = vsel %vm83, %v46, 0
    %v97 = vsel %vm83, %v47, 0
    %v100 = vsel %vm83, %v48, 0
    %v103 = vsel %vm83, %v49, 0
    %v106 = vsel %vm83, %v50, 0
    %v109 = vsel %vm83, %v51, 0
    %v112 = vsel %vm83, %v52, 0
    %v115 = vsel %vm83, %v53, 0
    %v118 = vsel %vm83, %v54, 0
    %v121 = vsel %vm83, %v55, 0
    %v124 = vsel %vm83, %v56, 0
    %v127 = vsel %vm83, %v57, 0
    %v130 = vsel %vm83, %v58, 0
    %132 = vmatprep.subr.mxu0 %v60
    %133 = vmatpush1.msra.mxu0 %v59
    %134 = vmatprep.subr.mxu0 %v68
    %135 = vmatpush1.msra.mxu0 %v67
    %136 = vmatprep.subr.mxu0 %v76
    %137 = vmatpush1.msra.mxu0 %v75
    %138 = vmatprep.subr.mxu0 0.0
    %139 = vmatpush1.msra.mxu0 0.0
    %140 = vmatprep.subr.mxu0 0.0
    %141 = vmatpush1.msra.mxu0 0.0
    %142 = vmatprep.subr.mxu0 0.0
    %143 = vmatpush1.msra.mxu0 0.0
    %144 = vmatprep.subr.mxu0 0.0
    %145 = vmatpush1.msra.mxu0 0.0
    %146 = vmatprep.subr.mxu0 0.0
    %147 = vmatpush1.msra.mxu0 0.0
    %148 = vmatprep.subr.mxu0 0.0
    %149 = vmatpush1.msra.mxu0 0.0
    %150 = vmatprep.subr.mxu0 0.0
    %151 = vmatpush1.msra.mxu0 0.0
    %152 = vmatprep.subr.mxu0 0.0
    %153 = vmatpush1.msra.mxu0 0.0
    %154 = vmatprep.subr.mxu0 0.0
    %155 = vmatpush1.msra.mxu0 0.0
    %156 = vmatprep.subr.mxu0 0.0
    %157 = vmatpush1.msra.mxu0 0.0
    %158 = vmatprep.subr.mxu0 0.0
    %159 = vmatpush1.msra.mxu0 0.0
    %160 = vmatprep.subr.mxu0 0.0
    %161 = vmatpush1.msra.mxu0 0.0
    %162 = vmatprep.subr.mxu0 0.0
    %163 = vmatpush1.msra.mxu0 0.0
    %164 = vmatprep.subr.mxu0 0.0
    %165 = vmatpush1.msra.mxu0 0.0
    %166 = vmatprep.subr.mxu0 0.0
    %167 = vmatpush1.msra.mxu0 0.0
    %168 = vmatprep.subr.mxu0 0.0
    %169 = vmatpush1.msra.mxu0 0.0
    %170 = vmatprep.subr.mxu0 0.0
    %171 = vmatpush1.msra.mxu0 0.0
    %172 = vmatprep.subr.mxu0 0.0
    %173 = vmatpush1.msra.mxu0 0.0
    %174 = vmatprep.subr.mxu0 0.0
    %175 = vmatpush1.msra.mxu0 0.0
    %176 = vmatprep.subr.mxu0 0.0
    %177 = vmatpush1.msra.mxu0 0.0
    %178 = vmatprep.subr.mxu0 0.0
    %179 = vmatpush1.msra.mxu0 0.0
    %180 = vmatprep.subr.mxu0 0.0
    %181 = vmatpush1.msra.mxu0 0.0
    %182 = vmatprep.subr.mxu0 0.0
    %183 = vmatpush1.msra.mxu0 0.0
    %184 = vmatprep.subr.mxu0 0.0
    %185 = vmatpush1.msra.mxu0 0.0
    %186 = vmatprep.subr.mxu0 0.0
    %187 = vmatpush1.msra.mxu0 0.0
    %188 = vmatprep.subr.mxu0 0.0
    %189 = vmatpush1.msra.mxu0 0.0
    %190 = vmatprep.subr.mxu0 0.0
    %191 = vmatpush1.msra.mxu0 0.0
    %192 = vmatprep.subr.mxu0 0.0
    %193 = vmatpush1.msra.mxu0 0.0
    %194 = vmatprep.subr.mxu0 0.0
    %195 = vmatpush1.msra.mxu0 0.0
    %196 = vmatprep.mubr.f32.mxu0 0.0
    %197 = vmatmul.mubr.f32.gmra.mrb[0].mxu0 %v85
    %v198 = vpop.f32.mrb[0].mxu0
    %v199 = vadd.f32 0.0, %v198
    %v200 = vpop.f32.mrb[0].mxu0
    %v201 = vadd.f32 0.0, %v200
    %202 = vmatprep.mubr.f32.mxu0 0.0
    %203 = vmatmul.mubr.f32.gmra.mrb[0].mxu0 %v88
    %v204 = vpop.f32.mrb[0].mxu0
    %v205 = vadd.f32 0.0, %v204
    %v206 = vpop.f32.mrb[0].mxu0
    %v207 = vadd.f32 0.0, %v206
    %208 = vmatprep.mubr.f32.mxu0 0.0
    %209 = vmatmul.mubr.f32.gmra.mrb[0].mxu0 %v91
    %v210 = vpop.f32.mrb[0].mxu0
    %v211 = vadd.f32 0.0, %v210
    %v212 = vpop.f32.mrb[0].mxu0
    %v213 = vadd.f32 0.0, %v212
    %214 = vmatprep.mubr.f32.mxu0 0.0
    %215 = vmatmul.mubr.f32.gmra.mrb[0].mxu0 %v94
    %v216 = vpop.f32.mrb[0].mxu0
    %v217 = vadd.f32 0.0, %v216
    %v218 = vpop.f32.mrb[0].mxu0
    %v219 = vadd.f32 0.0, %v218
    %220 = vmatprep.mubr.f32.mxu0 0.0
    %221 = vmatmul.mubr.f32.gmra.mrb[0].mxu0 %v97
    %v222 = vpop.f32.mrb[0].mxu0
    %v223 = vadd.f32 0.0, %v222
    %v224 = vpop.f32.mrb[0].mxu0
    %v225 = vadd.f32 0.0, %v224
    %226 = vmatprep.mubr.f32.mxu0 0.0
    %227 = vmatmul.mubr.f32.gmra.mrb[0].mxu0 %v100
    %v228 = vpop.f32.mrb[0].mxu0
    %v229 = vadd.f32 0.0, %v228
    %v230 = vpop.f32.mrb[0].mxu0
    %v231 = vadd.f32 0.0, %v230
    %232 = vmatprep.mubr.f32.mxu0 0.0
    %233 = vmatmul.mubr.f32.gmra.mrb[0].mxu0 %v103
    %v234 = vpop.f32.mrb[0].mxu0
    %v235 = vadd.f32 0.0, %v234
    %v236 = vpop.f32.mrb[0].mxu0
    %v237 = vadd.f32 0.0, %v236
    %238 = vmatprep.mubr.f32.mxu0 0.0
    %239 = vmatmul.mubr.f32.gmra.mrb[0].mxu0 %v106
    %v240 = vpop.f32.mrb[0].mxu0
    %v241 = vadd.f32 0.0, %v240
    %v242 = vpop.f32.mrb[0].mxu0
    %v243 = vadd.f32 0.0, %v242
    %244 = vmatprep.mubr.f32.mxu0 0.0
    %245 = vmatmul.mubr.f32.gmra.mrb[0].mxu0 %v109
    %v246 = vpop.f32.mrb[0].mxu0
    %v247 = vadd.f32 0.0, %v246
    %v248 = vpop.f32.mrb[0].mxu0
    %v249 = vadd.f32 0.0, %v248
    %250 = vmatprep.mubr.f32.mxu0 0.0
    %251 = vmatmul.mubr.f32.gmra.mrb[0].mxu0 %v112
    %v252 = vpop.f32.mrb[0].mxu0
    %v253 = vadd.f32 0.0, %v252
    %v254 = vpop.f32.mrb[0].mxu0
    %v255 = vadd.f32 0.0, %v254
    %256 = vmatprep.mubr.f32.mxu0 0.0
    %257 = vmatmul.mubr.f32.gmra.mrb[0].mxu0 %v115
    %v258 = vpop.f32.mrb[0].mxu0
    %v259 = vadd.f32 0.0, %v258
    %v260 = vpop.f32.mrb[0].mxu0
    %v261 = vadd.f32 0.0, %v260
    %262 = vmatprep.mubr.f32.mxu0 0.0
    %263 = vmatmul.mubr.f32.gmra.mrb[0].mxu0 %v118
    %v264 = vpop.f32.mrb[0].mxu0
    %v265 = vadd.f32 0.0, %v264
    %v266 = vpop.f32.mrb[0].mxu0
    %v267 = vadd.f32 0.0, %v266
    %268 = vmatprep.mubr.f32.mxu0 0.0
    %269 = vmatmul.mubr.f32.gmra.mrb[0].mxu0 %v121
    %v270 = vpop.f32.mrb[0].mxu0
    %v271 = vadd.f32 0.0, %v270
    %v272 = vpop.f32.mrb[0].mxu0
    %v273 = vadd.f32 0.0, %v272
    %274 = vmatprep.mubr.f32.mxu0 0.0
    %275 = vmatmul.mubr.f32.gmra.mrb[0].mxu0 %v124
    %v276 = vpop.f32.mrb[0].mxu0
    %v277 = vadd.f32 0.0, %v276
    %v278 = vpop.f32.mrb[0].mxu0
    %v279 = vadd.f32 0.0, %v278
    %280 = vmatprep.mubr.f32.mxu0 0.0
    %281 = vmatmul.mubr.f32.gmra.mrb[0].mxu0 %v127
    %v282 = vpop.f32.mrb[0].mxu0
    %v283 = vadd.f32 0.0, %v282
    %v284 = vpop.f32.mrb[0].mxu0
    %v285 = vadd.f32 0.0, %v284
    %286 = vmatprep.mubr.f32.mxu0 0.0
    %287 = vmatmul.mubr.f32.gmra.mrb[0].mxu0 %v130
    %v288 = vpop.f32.mrb[0].mxu0
    %v289 = vadd.f32 0.0, %v288
    %v290 = vpop.f32.mrb[0].mxu0
    %v291 = vadd.f32 0.0, %v290
    %292 = vdwg.mxu0
    %293 = vmatprep.subr.mxu0 %v62
    %294 = vmatpush1.msra.mxu0 %v61
    %295 = vmatprep.subr.mxu0 %v70
    %296 = vmatpush1.msra.mxu0 %v69
    %297 = vmatprep.subr.mxu0 %v78
    %298 = vmatpush1.msra.mxu0 %v77
    %299 = vmatprep.subr.mxu0 0.0
    %300 = vmatpush1.msra.mxu0 0.0
    %301 = vmatprep.subr.mxu0 0.0
    %302 = vmatpush1.msra.mxu0 0.0
    %303 = vmatprep.subr.mxu0 0.0
    %304 = vmatpush1.msra.mxu0 0.0
    %305 = vmatprep.subr.mxu0 0.0
    %306 = vmatpush1.msra.mxu0 0.0
    %307 = vmatprep.subr.mxu0 0.0
    %308 = vmatpush1.msra.mxu0 0.0
    %309 = vmatprep.subr.mxu0 0.0
    %310 = vmatpush1.msra.mxu0 0.0
    %311 = vmatprep.subr.mxu0 0.0
    %312 = vmatpush1.msra.mxu0 0.0
    %313 = vmatprep.subr.mxu0 0.0
    %314 = vmatpush1.msra.mxu0 0.0
    %315 = vmatprep.subr.mxu0 0.0
    %316 = vmatpush1.msra.mxu0 0.0
    %317 = vmatprep.subr.mxu0 0.0
    %318 = vmatpush1.msra.mxu0 0.0
    %319 = vmatprep.subr.mxu0 0.0
    %320 = vmatpush1.msra.mxu0 0.0
    %321 = vmatprep.subr.mxu0 0.0
    %322 = vmatpush1.msra.mxu0 0.0
    %323 = vmatprep.subr.mxu0 0.0
    %324 = vmatpush1.msra.mxu0 0.0
    %325 = vmatprep.subr.mxu0 0.0
    %326 = vmatpush1.msra.mxu0 0.0
    %327 = vmatprep.subr.mxu0 0.0
    %328 = vmatpush1.msra.mxu0 0.0
    %329 = vmatprep.subr.mxu0 0.0
    %330 = vmatpush1.msra.mxu0 0.0
    %331 = vmatprep.subr.mxu0 0.0
    %332 = vmatpush1.msra.mxu0 0.0
    %333 = vmatprep.subr.mxu0 0.0
    %334 = vmatpush1.msra.mxu0 0.0
    %335 = vmatprep.subr.mxu0 0.0
    %336 = vmatpush1.msra.mxu0 0.0
    %337 = vmatprep.subr.mxu0 0.0
    %338 = vmatpush1.msra.mxu0 0.0
    %339 = vmatprep.subr.mxu0 0.0
    %340 = vmatpush1.msra.mxu0 0.0
    %341 = vmatprep.subr.mxu0 0.0
    %342 = vmatpush1.msra.mxu0 0.0
    %343 = vmatprep.subr.mxu0 0.0
    %344 = vmatpush1.msra.mxu0 0.0
    %345 = vmatprep.subr.mxu0 0.0
    %346 = vmatpush1.msra.mxu0 0.0
    %347 = vmatprep.subr.mxu0 0.0
    %348 = vmatpush1.msra.mxu0 0.0
    %349 = vmatprep.subr.mxu0 0.0
    %350 = vmatpush1.msra.mxu0 0.0
    %351 = vmatprep.subr.mxu0 0.0
    %352 = vmatpush1.msra.mxu0 0.0
    %353 = vmatprep.subr.mxu0 0.0
    %354 = vmatpush1.msra.mxu0 0.0
    %355 = vmatprep.subr.mxu0 0.0
    %356 = vmatpush1.msra.mxu0 0.0
    %357 = vmatprep.mubr.f32.mxu0 0.0
    %358 = vmatmul.mubr.f32.gmra.mrb[0].mxu0 %v85
    %v359 = vpop.f32.mrb[0].mxu0
    %v360 = vadd.f32 0.0, %v359
    %v361 = vpop.f32.mrb[0].mxu0
    %v362 = vadd.f32 0.0, %v361
    %363 = vmatprep.mubr.f32.mxu0 0.0
    %364 = vmatmul.mubr.f32.gmra.mrb[0].mxu0 %v88
    %v365 = vpop.f32.mrb[0].mxu0
    %v366 = vadd.f32 0.0, %v365
    %v367 = vpop.f32.mrb[0].mxu0
    %v368 = vadd.f32 0.0, %v367
    %369 = vmatprep.mubr.f32.mxu0 0.0
    %370 = vmatmul.mubr.f32.gmra.mrb[0].mxu0 %v91
    %v371 = vpop.f32.mrb[0].mxu0
    %v372 = vadd.f32 0.0, %v371
    %v373 = vpop.f32.mrb[0].mxu0
    %v374 = vadd.f32 0.0, %v373
    %375 = vmatprep.mubr.f32.mxu0 0.0
    %376 = vmatmul.mubr.f32.gmra.mrb[0].mxu0 %v94
    %v377 = vpop.f32.mrb[0].mxu0
    %v378 = vadd.f32 0.0, %v377
    %v379 = vpop.f32.mrb[0].mxu0
    %v380 = vadd.f32 0.0, %v379
    %381 = vmatprep.mubr.f32.mxu0 0.0
    %382 = vmatmul.mubr.f32.gmra.mrb[0].mxu0 %v97
    %v383 = vpop.f32.mrb[0].mxu0
    %v384 = vadd.f32 0.0, %v383
    %v385 = vpop.f32.mrb[0].mxu0
    %v386 = vadd.f32 0.0, %v385
    %387 = vmatprep.mubr.f32.mxu0 0.0
    %388 = vmatmul.mubr.f32.gmra.mrb[0].mxu0 %v100
    %v389 = vpop.f32.mrb[0].mxu0
    %v390 = vadd.f32 0.0, %v389
    %v391 = vpop.f32.mrb[0].mxu0
    %v392 = vadd.f32 0.0, %v391
    %393 = vmatprep.mubr.f32.mxu0 0.0
    %394 = vmatmul.mubr.f32.gmra.mrb[0].mxu0 %v103
    %v395 = vpop.f32.mrb[0].mxu0
    %v396 = vadd.f32 0.0, %v395
    %v397 = vpop.f32.mrb[0].mxu0
    %v398 = vadd.f32 0.0, %v397
    %399 = vmatprep.mubr.f32.mxu0 0.0
    %400 = vmatmul.mubr.f32.gmra.mrb[0].mxu0 %v106
    %v401 = vpop.f32.mrb[0].mxu0
    %v402 = vadd.f32 0.0, %v401
    %v403 = vpop.f32.mrb[0].mxu0
    %v404 = vadd.f32 0.0, %v403
    %405 = vmatprep.mubr.f32.mxu0 0.0
    %406 = vmatmul.mubr.f32.gmra.mrb[0].mxu0 %v109
    %v407 = vpop.f32.mrb[0].mxu0
    %v408 = vadd.f32 0.0, %v407
    %v409 = vpop.f32.mrb[0].mxu0
    %v410 = vadd.f32 0.0, %v409
    %411 = vmatprep.mubr.f32.mxu0 0.0
    %412 = vmatmul.mubr.f32.gmra.mrb[0].mxu0 %v112
    %v413 = vpop.f32.mrb[0].mxu0
    %v414 = vadd.f32 0.0, %v413
    %v415 = vpop.f32.mrb[0].mxu0
    %v416 = vadd.f32 0.0, %v415
    %417 = vmatprep.mubr.f32.mxu0 0.0
    %418 = vmatmul.mubr.f32.gmra.mrb[0].mxu0 %v115
    %v419 = vpop.f32.mrb[0].mxu0
    %v420 = vadd.f32 0.0, %v419
    %v421 = vpop.f32.mrb[0].mxu0
    %v422 = vadd.f32 0.0, %v421
    %423 = vmatprep.mubr.f32.mxu0 0.0
    %424 = vmatmul.mubr.f32.gmra.mrb[0].mxu0 %v118
    %v425 = vpop.f32.mrb[0].mxu0
    %v426 = vadd.f32 0.0, %v425
    %v427 = vpop.f32.mrb[0].mxu0
    %v428 = vadd.f32 0.0, %v427
    %429 = vmatprep.mubr.f32.mxu0 0.0
    %430 = vmatmul.mubr.f32.gmra.mrb[0].mxu0 %v121
    %v431 = vpop.f32.mrb[0].mxu0
    %v432 = vadd.f32 0.0, %v431
    %v433 = vpop.f32.mrb[0].mxu0
    %v434 = vadd.f32 0.0, %v433
    %435 = vmatprep.mubr.f32.mxu0 0.0
    %436 = vmatmul.mubr.f32.gmra.mrb[0].mxu0 %v124
    %v437 = vpop.f32.mrb[0].mxu0
    %v438 = vadd.f32 0.0, %v437
    %v439 = vpop.f32.mrb[0].mxu0
    %v440 = vadd.f32 0.0, %v439
    %441 = vmatprep.mubr.f32.mxu0 0.0
    %442 = vmatmul.mubr.f32.gmra.mrb[0].mxu0 %v127
    %v443 = vpop.f32.mrb[0].mxu0
    %v444 = vadd.f32 0.0, %v443
    %v445 = vpop.f32.mrb[0].mxu0
    %v446 = vadd.f32 0.0, %v445
    %447 = vmatprep.mubr.f32.mxu0 0.0
    %448 = vmatmul.mubr.f32.gmra.mrb[0].mxu0 %v130
    %v449 = vpop.f32.mrb[0].mxu0
    %v450 = vadd.f32 0.0, %v449
    %v451 = vpop.f32.mrb[0].mxu0
    %v452 = vadd.f32 0.0, %v451
    %453 = vdwg.mxu0
    %454 = vmatprep.subr.mxu0 %v64
    %455 = vmatpush1.msra.mxu0 %v63
    %456 = vmatprep.subr.mxu0 %v72
    %457 = vmatpush1.msra.mxu0 %v71
    %458 = vmatprep.subr.mxu0 %v80
    %459 = vmatpush1.msra.mxu0 %v79
    %460 = vmatprep.subr.mxu0 0.0
    %461 = vmatpush1.msra.mxu0 0.0
    %462 = vmatprep.subr.mxu0 0.0
    %463 = vmatpush1.msra.mxu0 0.0
    %464 = vmatprep.subr.mxu0 0.0
    %465 = vmatpush1.msra.mxu0 0.0
    %466 = vmatprep.subr.mxu0 0.0
    %467 = vmatpush1.msra.mxu0 0.0
    %468 = vmatprep.subr.mxu0 0.0
    %469 = vmatpush1.msra.mxu0 0.0
    %470 = vmatprep.subr.mxu0 0.0
    %471 = vmatpush1.msra.mxu0 0.0
    %472 = vmatprep.subr.mxu0 0.0
    %473 = vmatpush1.msra.mxu0 0.0
    %474 = vmatprep.subr.mxu0 0.0
    %475 = vmatpush1.msra.mxu0 0.0
    %476 = vmatprep.subr.mxu0 0.0
    %477 = vmatpush1.msra.mxu0 0.0
    %478 = vmatprep.subr.mxu0 0.0
    %479 = vmatpush1.msra.mxu0 0.0
    %480 = vmatprep.subr.mxu0 0.0
    %481 = vmatpush1.msra.mxu0 0.0
    %482 = vmatprep.subr.mxu0 0.0
    %483 = vmatpush1.msra.mxu0 0.0
    %484 = vmatprep.subr.mxu0 0.0
    %485 = vmatpush1.msra.mxu0 0.0
    %486 = vmatprep.subr.mxu0 0.0
    %487 = vmatpush1.msra.mxu0 0.0
    %488 = vmatprep.subr.mxu0 0.0
    %489 = vmatpush1.msra.mxu0 0.0
    %490 = vmatprep.subr.mxu0 0.0
    %491 = vmatpush1.msra.mxu0 0.0
    %492 = vmatprep.subr.mxu0 0.0
    %493 = vmatpush1.msra.mxu0 0.0
    %494 = vmatprep.subr.mxu0 0.0
    %495 = vmatpush1.msra.mxu0 0.0
    %496 = vmatprep.subr.mxu0 0.0
    %497 = vmatpush1.msra.mxu0 0.0
    %498 = vmatprep.subr.mxu0 0.0
    %499 = vmatpush1.msra.mxu0 0.0
    %500 = vmatprep.subr.mxu0 0.0
    %501 = vmatpush1.msra.mxu0 0.0
    %502 = vmatprep.subr.mxu0 0.0
    %503 = vmatpush1.msra.mxu0 0.0
    %504 = vmatprep.subr.mxu0 0.0
    %505 = vmatpush1.msra.mxu0 0.0
    %506 = vmatprep.subr.mxu0 0.0
    %507 = vmatpush1.msra.mxu0 0.0
    %508 = vmatprep.subr.mxu0 0.0
    %509 = vmatpush1.msra.mxu0 0.0
    %510 = vmatprep.subr.mxu0 0.0
    %511 = vmatpush1.msra.mxu0 0.0
    %512 = vmatprep.subr.mxu0 0.0
    %513 = vmatpush1.msra.mxu0 0.0
    %514 = vmatprep.subr.mxu0 0.0
    %515 = vmatpush1.msra.mxu0 0.0
    %516 = vmatprep.subr.mxu0 0.0
    %517 = vmatpush1.msra.mxu0 0.0
    %518 = vmatprep.mubr.f32.mxu0 0.0
    %519 = vmatmul.mubr.f32.gmra.mrb[0].mxu0 %v85
    %v520 = vpop.f32.mrb[0].mxu0
    %v521 = vadd.f32 0.0, %v520
    %v522 = vpop.f32.mrb[0].mxu0
    %v523 = vadd.f32 0.0, %v522
    %524 = vmatprep.mubr.f32.mxu0 0.0
    %525 = vmatmul.mubr.f32.gmra.mrb[0].mxu0 %v88
    %v526 = vpop.f32.mrb[0].mxu0
    %v527 = vadd.f32 0.0, %v526
    %v528 = vpop.f32.mrb[0].mxu0
    %v529 = vadd.f32 0.0, %v528
    %530 = vmatprep.mubr.f32.mxu0 0.0
    %531 = vmatmul.mubr.f32.gmra.mrb[0].mxu0 %v91
    %v532 = vpop.f32.mrb[0].mxu0
    %v533 = vadd.f32 0.0, %v532
    %v534 = vpop.f32.mrb[0].mxu0
    %v535 = vadd.f32 0.0, %v534
    %536 = vmatprep.mubr.f32.mxu0 0.0
    %537 = vmatmul.mubr.f32.gmra.mrb[0].mxu0 %v94
    %v538 = vpop.f32.mrb[0].mxu0
    %v539 = vadd.f32 0.0, %v538
    %v540 = vpop.f32.mrb[0].mxu0
    %v541 = vadd.f32 0.0, %v540
    %542 = vmatprep.mubr.f32.mxu0 0.0
    %543 = vmatmul.mubr.f32.gmra.mrb[0].mxu0 %v97
    %v544 = vpop.f32.mrb[0].mxu0
    %v545 = vadd.f32 0.0, %v544
    %v546 = vpop.f32.mrb[0].mxu0
    %v547 = vadd.f32 0.0, %v546
    %548 = vmatprep.mubr.f32.mxu0 0.0
    %549 = vmatmul.mubr.f32.gmra.mrb[0].mxu0 %v100
    %v550 = vpop.f32.mrb[0].mxu0
    %v551 = vadd.f32 0.0, %v550
    %v552 = vpop.f32.mrb[0].mxu0
    %v553 = vadd.f32 0.0, %v552
    %554 = vmatprep.mubr.f32.mxu0 0.0
    %555 = vmatmul.mubr.f32.gmra.mrb[0].mxu0 %v103
    %v556 = vpop.f32.mrb[0].mxu0
    %v557 = vadd.f32 0.0, %v556
    %v558 = vpop.f32.mrb[0].mxu0
    %v559 = vadd.f32 0.0, %v558
    %560 = vmatprep.mubr.f32.mxu0 0.0
    %561 = vmatmul.mubr.f32.gmra.mrb[0].mxu0 %v106
    %v562 = vpop.f32.mrb[0].mxu0
    %v563 = vadd.f32 0.0, %v562
    %v564 = vpop.f32.mrb[0].mxu0
    %v565 = vadd.f32 0.0, %v564
    %566 = vmatprep.mubr.f32.mxu0 0.0
    %567 = vmatmul.mubr.f32.gmra.mrb[0].mxu0 %v109
    %v568 = vpop.f32.mrb[0].mxu0
    %v569 = vadd.f32 0.0, %v568
    %v570 = vpop.f32.mrb[0].mxu0
    %v571 = vadd.f32 0.0, %v570
    %572 = vmatprep.mubr.f32.mxu0 0.0
    %573 = vmatmul.mubr.f32.gmra.mrb[0].mxu0 %v112
    %v574 = vpop.f32.mrb[0].mxu0
    %v575 = vadd.f32 0.0, %v574
    %v576 = vpop.f32.mrb[0].mxu0
    %v577 = vadd.f32 0.0, %v576
    %578 = vmatprep.mubr.f32.mxu0 0.0
    %579 = vmatmul.mubr.f32.gmra.mrb[0].mxu0 %v115
    %v580 = vpop.f32.mrb[0].mxu0
    %v581 = vadd.f32 0.0, %v580
    %v582 = vpop.f32.mrb[0].mxu0
    %v583 = vadd.f32 0.0, %v582
    %584 = vmatprep.mubr.f32.mxu0 0.0
    %585 = vmatmul.mubr.f32.gmra.mrb[0].mxu0 %v118
    %v586 = vpop.f32.mrb[0].mxu0
    %v587 = vadd.f32 0.0, %v586
    %v588 = vpop.f32.mrb[0].mxu0
    %v589 = vadd.f32 0.0, %v588
    %590 = vmatprep.mubr.f32.mxu0 0.0
    %591 = vmatmul.mubr.f32.gmra.mrb[0].mxu0 %v121
    %v592 = vpop.f32.mrb[0].mxu0
    %v593 = vadd.f32 0.0, %v592
    %v594 = vpop.f32.mrb[0].mxu0
    %v595 = vadd.f32 0.0, %v594
    %596 = vmatprep.mubr.f32.mxu0 0.0
    %597 = vmatmul.mubr.f32.gmra.mrb[0].mxu0 %v124
    %v598 = vpop.f32.mrb[0].mxu0
    %v599 = vadd.f32 0.0, %v598
    %v600 = vpop.f32.mrb[0].mxu0
    %v601 = vadd.f32 0.0, %v600
    %602 = vmatprep.mubr.f32.mxu0 0.0
    %603 = vmatmul.mubr.f32.gmra.mrb[0].mxu0 %v127
    %v604 = vpop.f32.mrb[0].mxu0
    %v605 = vadd.f32 0.0, %v604
    %v606 = vpop.f32.mrb[0].mxu0
    %v607 = vadd.f32 0.0, %v606
    %608 = vmatprep.mubr.f32.mxu0 0.0
    %609 = vmatmul.mubr.f32.gmra.mrb[0].mxu0 %v130
    %v610 = vpop.f32.mrb[0].mxu0
    %v611 = vadd.f32 0.0, %v610
    %v612 = vpop.f32.mrb[0].mxu0
    %v613 = vadd.f32 0.0, %v612
    %614 = vdwg.mxu0
    %615 = vmatprep.subr.mxu0 %v66
    %616 = vmatpush1.msra.mxu0 %v65
    %617 = vmatprep.subr.mxu0 %v74
    %618 = vmatpush1.msra.mxu0 %v73
    %619 = vmatprep.subr.mxu0 %v82
    %620 = vmatpush1.msra.mxu0 %v81
    %621 = vmatprep.subr.mxu0 0.0
    %622 = vmatpush1.msra.mxu0 0.0
    %623 = vmatprep.subr.mxu0 0.0
    %624 = vmatpush1.msra.mxu0 0.0
    %625 = vmatprep.subr.mxu0 0.0
    %626 = vmatpush1.msra.mxu0 0.0
    %627 = vmatprep.subr.mxu0 0.0
    %628 = vmatpush1.msra.mxu0 0.0
    %629 = vmatprep.subr.mxu0 0.0
    %630 = vmatpush1.msra.mxu0 0.0
    %631 = vmatprep.subr.mxu0 0.0
    %632 = vmatpush1.msra.mxu0 0.0
    %633 = vmatprep.subr.mxu0 0.0
    %634 = vmatpush1.msra.mxu0 0.0
    %635 = vmatprep.subr.mxu0 0.0
    %636 = vmatpush1.msra.mxu0 0.0
    %637 = vmatprep.subr.mxu0 0.0
    %638 = vmatpush1.msra.mxu0 0.0
    %639 = vmatprep.subr.mxu0 0.0
    %640 = vmatpush1.msra.mxu0 0.0
    %641 = vmatprep.subr.mxu0 0.0
    %642 = vmatpush1.msra.mxu0 0.0
    %643 = vmatprep.subr.mxu0 0.0
    %644 = vmatpush1.msra.mxu0 0.0
    %645 = vmatprep.subr.mxu0 0.0
    %646 = vmatpush1.msra.mxu0 0.0
    %647 = vmatprep.subr.mxu0 0.0
    %648 = vmatpush1.msra.mxu0 0.0
    %649 = vmatprep.subr.mxu0 0.0
    %650 = vmatpush1.msra.mxu0 0.0
    %651 = vmatprep.subr.mxu0 0.0
    %652 = vmatpush1.msra.mxu0 0.0
    %653 = vmatprep.subr.mxu0 0.0
    %654 = vmatpush1.msra.mxu0 0.0
    %655 = vmatprep.subr.mxu0 0.0
    %656 = vmatpush1.msra.mxu0 0.0
    %657 = vmatprep.subr.mxu0 0.0
    %658 = vmatpush1.msra.mxu0 0.0
    %659 = vmatprep.subr.mxu0 0.0
    %660 = vmatpush1.msra.mxu0 0.0
    %661 = vmatprep.subr.mxu0 0.0
    %662 = vmatpush1.msra.mxu0 0.0
    %663 = vmatprep.subr.mxu0 0.0
    %664 = vmatpush1.msra.mxu0 0.0
    %665 = vmatprep.subr.mxu0 0.0
    %666 = vmatpush1.msra.mxu0 0.0
    %667 = vmatprep.subr.mxu0 0.0
    %668 = vmatpush1.msra.mxu0 0.0
    %669 = vmatprep.subr.mxu0 0.0
    %670 = vmatpush1.msra.mxu0 0.0
    %671 = vmatprep.subr.mxu0 0.0
    %672 = vmatpush1.msra.mxu0 0.0
    %673 = vmatprep.subr.mxu0 0.0
    %674 = vmatpush1.msra.mxu0 0.0
    %675 = vmatprep.subr.mxu0 0.0
    %676 = vmatpush1.msra.mxu0 0.0
    %677 = vmatprep.subr.mxu0 0.0
    %678 = vmatpush1.msra.mxu0 0.0
    %679 = vmatprep.mubr.f32.mxu0 0.0
    %680 = vmatmul.mubr.f32.gmra.mrb[0].mxu0 %v85
    %v681 = vpop.f32.mrb[0].mxu0
    %v682 = vadd.f32 0.0, %v681
    %v683 = vpop.f32.mrb[0].mxu0
    %v684 = vadd.f32 0.0, %v683
    %685 = vmatprep.mubr.f32.mxu0 0.0
    %686 = vmatmul.mubr.f32.gmra.mrb[0].mxu0 %v88
    %v687 = vpop.f32.mrb[0].mxu0
    %v688 = vadd.f32 0.0, %v687
    %v689 = vpop.f32.mrb[0].mxu0
    %v690 = vadd.f32 0.0, %v689
    %691 = vmatprep.mubr.f32.mxu0 0.0
    %692 = vmatmul.mubr.f32.gmra.mrb[0].mxu0 %v91
    %v693 = vpop.f32.mrb[0].mxu0
    %v694 = vadd.f32 0.0, %v693
    %v695 = vpop.f32.mrb[0].mxu0
    %v696 = vadd.f32 0.0, %v695
    %697 = vmatprep.mubr.f32.mxu0 0.0
    %698 = vmatmul.mubr.f32.gmra.mrb[0].mxu0 %v94
    %v699 = vpop.f32.mrb[0].mxu0
    %v700 = vadd.f32 0.0, %v699
    %v701 = vpop.f32.mrb[0].mxu0
    %v702 = vadd.f32 0.0, %v701
    %703 = vmatprep.mubr.f32.mxu0 0.0
    %704 = vmatmul.mubr.f32.gmra.mrb[0].mxu0 %v97
    %v705 = vpop.f32.mrb[0].mxu0
    %v706 = vadd.f32 0.0, %v705
    %v707 = vpop.f32.mrb[0].mxu0
    %v708 = vadd.f32 0.0, %v707
    %709 = vmatprep.mubr.f32.mxu0 0.0
    %710 = vmatmul.mubr.f32.gmra.mrb[0].mxu0 %v100
    %v711 = vpop.f32.mrb[0].mxu0
    %v712 = vadd.f32 0.0, %v711
    %v713 = vpop.f32.mrb[0].mxu0
    %v714 = vadd.f32 0.0, %v713
    %715 = vmatprep.mubr.f32.mxu0 0.0
    %716 = vmatmul.mubr.f32.gmra.mrb[0].mxu0 %v103
    %v717 = vpop.f32.mrb[0].mxu0
    %v718 = vadd.f32 0.0, %v717
    %v719 = vpop.f32.mrb[0].mxu0
    %v720 = vadd.f32 0.0, %v719
    %721 = vmatprep.mubr.f32.mxu0 0.0
    %722 = vmatmul.mubr.f32.gmra.mrb[0].mxu0 %v106
    %v723 = vpop.f32.mrb[0].mxu0
    %v724 = vadd.f32 0.0, %v723
    %v725 = vpop.f32.mrb[0].mxu0
    %v726 = vadd.f32 0.0, %v725
    %727 = vmatprep.mubr.f32.mxu0 0.0
    %728 = vmatmul.mubr.f32.gmra.mrb[0].mxu0 %v109
    %v729 = vpop.f32.mrb[0].mxu0
    %v730 = vadd.f32 0.0, %v729
    %v731 = vpop.f32.mrb[0].mxu0
    %v732 = vadd.f32 0.0, %v731
    %733 = vmatprep.mubr.f32.mxu0 0.0
    %734 = vmatmul.mubr.f32.gmra.mrb[0].mxu0 %v112
    %v735 = vpop.f32.mrb[0].mxu0
    %v736 = vadd.f32 0.0, %v735
    %v737 = vpop.f32.mrb[0].mxu0
    %v738 = vadd.f32 0.0, %v737
    %739 = vmatprep.mubr.f32.mxu0 0.0
    %740 = vmatmul.mubr.f32.gmra.mrb[0].mxu0 %v115
    %v741 = vpop.f32.mrb[0].mxu0
    %v742 = vadd.f32 0.0, %v741
    %v743 = vpop.f32.mrb[0].mxu0
    %v744 = vadd.f32 0.0, %v743
    %745 = vmatprep.mubr.f32.mxu0 0.0
    %746 = vmatmul.mubr.f32.gmra.mrb[0].mxu0 %v118
    %v747 = vpop.f32.mrb[0].mxu0
    %v748 = vadd.f32 0.0, %v747
    %v749 = vpop.f32.mrb[0].mxu0
    %v750 = vadd.f32 0.0, %v749
    %751 = vmatprep.mubr.f32.mxu0 0.0
    %752 = vmatmul.mubr.f32.gmra.mrb[0].mxu0 %v121
    %v753 = vpop.f32.mrb[0].mxu0
    %v754 = vadd.f32 0.0, %v753
    %v755 = vpop.f32.mrb[0].mxu0
    %v756 = vadd.f32 0.0, %v755
    %757 = vmatprep.mubr.f32.mxu0 0.0
    %758 = vmatmul.mubr.f32.gmra.mrb[0].mxu0 %v124
    %v759 = vpop.f32.mrb[0].mxu0
    %v760 = vadd.f32 0.0, %v759
    %v761 = vpop.f32.mrb[0].mxu0
    %v762 = vadd.f32 0.0, %v761
    %763 = vmatprep.mubr.f32.mxu0 0.0
    %764 = vmatmul.mubr.f32.gmra.mrb[0].mxu0 %v127
    %v765 = vpop.f32.mrb[0].mxu0
    %v766 = vadd.f32 0.0, %v765
    %v767 = vpop.f32.mrb[0].mxu0
    %v768 = vadd.f32 0.0, %v767
    %769 = vmatprep.mubr.f32.mxu0 0.0
    %770 = vmatmul.mubr.f32.gmra.mrb[0].mxu0 %v130
    %v771 = vpop.f32.mrb[0].mxu0
    %v772 = vadd.f32 0.0, %v771
    %v773 = vpop.f32.mrb[0].mxu0
    %v774 = vadd.f32 0.0, %v773
    %775 = vdwg.mxu0
    %v776 = vmul.f32 %v199, %v521
    %v777 = vmul.f32 %v201, %v523
    %v778 = vmul.f32 %v205, %v527
    %v779 = vmul.f32 %v207, %v529
    %v780 = vmul.f32 %v211, %v533
    %v781 = vmul.f32 %v213, %v535
    %v782 = vmul.f32 %v217, %v539
    %v783 = vmul.f32 %v219, %v541
    %v784 = vmul.f32 %v223, %v545
    %v785 = vmul.f32 %v225, %v547
    %v786 = vmul.f32 %v229, %v551
    %v787 = vmul.f32 %v231, %v553
    %v788 = vmul.f32 %v235, %v557
    %v789 = vmul.f32 %v237, %v559
    %v790 = vmul.f32 %v241, %v563
    %v791 = vmul.f32 %v243, %v565
    %v792 = vmul.f32 %v247, %v569
    %v793 = vmul.f32 %v249, %v571
    %v794 = vmul.f32 %v253, %v575
    %v795 = vmul.f32 %v255, %v577
    %v796 = vmul.f32 %v259, %v581
    %v797 = vmul.f32 %v261, %v583
    %v798 = vmul.f32 %v265, %v587
    %v799 = vmul.f32 %v267, %v589
    %v800 = vmul.f32 %v271, %v593
    %v801 = vmul.f32 %v273, %v595
    %v802 = vmul.f32 %v277, %v599
    %v803 = vmul.f32 %v279, %v601
    %v804 = vmul.f32 %v283, %v605
    %v805 = vmul.f32 %v285, %v607
    %v806 = vmul.f32 %v289, %v611
    %v807 = vmul.f32 %v291, %v613
    %v808 = vmul.f32 %v360, %v682
    %v809 = vmul.f32 %v362, %v684
    %v810 = vmul.f32 %v366, %v688
    %v811 = vmul.f32 %v368, %v690
    %v812 = vmul.f32 %v372, %v694
    %v813 = vmul.f32 %v374, %v696
    %v814 = vmul.f32 %v378, %v700
    %v815 = vmul.f32 %v380, %v702
    %v816 = vmul.f32 %v384, %v706
    %v817 = vmul.f32 %v386, %v708
    %v818 = vmul.f32 %v390, %v712
    %v819 = vmul.f32 %v392, %v714
    %v820 = vmul.f32 %v396, %v718
    %v821 = vmul.f32 %v398, %v720
    %v822 = vmul.f32 %v402, %v724
    %v823 = vmul.f32 %v404, %v726
    %v824 = vmul.f32 %v408, %v730
    %v825 = vmul.f32 %v410, %v732
    %v826 = vmul.f32 %v414, %v736
    %v827 = vmul.f32 %v416, %v738
    %v828 = vmul.f32 %v420, %v742
    %v829 = vmul.f32 %v422, %v744
    %v830 = vmul.f32 %v426, %v748
    %v831 = vmul.f32 %v428, %v750
    %v832 = vmul.f32 %v432, %v754
    %v833 = vmul.f32 %v434, %v756
    %v834 = vmul.f32 %v438, %v760
    %v835 = vmul.f32 %v440, %v762
    %v836 = vmul.f32 %v444, %v766
    %v837 = vmul.f32 %v446, %v768
    %v838 = vmul.f32 %v450, %v772
    %v839 = vmul.f32 %v452, %v774
    %v840 = vsub.f32 %v776, %v808
    %v841 = vsub.f32 %v777, %v809
    %v842 = vsub.f32 %v778, %v810
    %v843 = vsub.f32 %v779, %v811
    %v844 = vsub.f32 %v780, %v812
    %v845 = vsub.f32 %v781, %v813
    %v846 = vsub.f32 %v782, %v814
    %v847 = vsub.f32 %v783, %v815
    %v848 = vsub.f32 %v784, %v816
    %v849 = vsub.f32 %v785, %v817
    %v850 = vsub.f32 %v786, %v818
    %v851 = vsub.f32 %v787, %v819
    %v852 = vsub.f32 %v788, %v820
    %v853 = vsub.f32 %v789, %v821
    %v854 = vsub.f32 %v790, %v822
    %v855 = vsub.f32 %v791, %v823
    %v856 = vsub.f32 %v792, %v824
    %v857 = vsub.f32 %v793, %v825
    %v858 = vsub.f32 %v794, %v826
    %v859 = vsub.f32 %v795, %v827
    %v860 = vsub.f32 %v796, %v828
    %v861 = vsub.f32 %v797, %v829
    %v862 = vsub.f32 %v798, %v830
    %v863 = vsub.f32 %v799, %v831
    %v864 = vsub.f32 %v800, %v832
    %v865 = vsub.f32 %v801, %v833
    %v866 = vsub.f32 %v802, %v834
    %v867 = vsub.f32 %v803, %v835
    %v868 = vsub.f32 %v804, %v836
    %v869 = vsub.f32 %v805, %v837
    %v870 = vsub.f32 %v806, %v838
    %v871 = vsub.f32 %v807, %v839
    %v872 = vmul.f32 %v199, %v682
    %v873 = vmul.f32 %v201, %v684
    %v874 = vmul.f32 %v205, %v688
    %v875 = vmul.f32 %v207, %v690
    %v876 = vmul.f32 %v211, %v694
    %v877 = vmul.f32 %v213, %v696
    %v878 = vmul.f32 %v217, %v700
    %v879 = vmul.f32 %v219, %v702
    %v880 = vmul.f32 %v223, %v706
    %v881 = vmul.f32 %v225, %v708
    %v882 = vmul.f32 %v229, %v712
    %v883 = vmul.f32 %v231, %v714
    %v884 = vmul.f32 %v235, %v718
    %v885 = vmul.f32 %v237, %v720
    %v886 = vmul.f32 %v241, %v724
    %v887 = vmul.f32 %v243, %v726
    %v888 = vmul.f32 %v247, %v730
    %v889 = vmul.f32 %v249, %v732
    %v890 = vmul.f32 %v253, %v736
    %v891 = vmul.f32 %v255, %v738
    %v892 = vmul.f32 %v259, %v742
    %v893 = vmul.f32 %v261, %v744
    %v894 = vmul.f32 %v265, %v748
    %v895 = vmul.f32 %v267, %v750
    %v896 = vmul.f32 %v271, %v754
    %v897 = vmul.f32 %v273, %v756
    %v898 = vmul.f32 %v277, %v760
    %v899 = vmul.f32 %v279, %v762
    %v900 = vmul.f32 %v283, %v766
    %v901 = vmul.f32 %v285, %v768
    %v902 = vmul.f32 %v289, %v772
    %v903 = vmul.f32 %v291, %v774
    %v904 = vmul.f32 %v360, %v521
    %v905 = vmul.f32 %v362, %v523
    %v906 = vmul.f32 %v366, %v527
    %v907 = vmul.f32 %v368, %v529
    %v908 = vmul.f32 %v372, %v533
    %v909 = vmul.f32 %v374, %v535
    %v910 = vmul.f32 %v378, %v539
    %v911 = vmul.f32 %v380, %v541
    %v912 = vmul.f32 %v384, %v545
    %v913 = vmul.f32 %v386, %v547
    %v914 = vmul.f32 %v390, %v551
    %v915 = vmul.f32 %v392, %v553
    %v916 = vmul.f32 %v396, %v557
    %v917 = vmul.f32 %v398, %v559
    %v918 = vmul.f32 %v402, %v563
    %v919 = vmul.f32 %v404, %v565
    %v920 = vmul.f32 %v408, %v569
    %v921 = vmul.f32 %v410, %v571
    %v922 = vmul.f32 %v414, %v575
    %v923 = vmul.f32 %v416, %v577
    %v924 = vmul.f32 %v420, %v581
    %v925 = vmul.f32 %v422, %v583
    %v926 = vmul.f32 %v426, %v587
    %v927 = vmul.f32 %v428, %v589
    %v928 = vmul.f32 %v432, %v593
    %v929 = vmul.f32 %v434, %v595
    %v930 = vmul.f32 %v438, %v599
    %v931 = vmul.f32 %v440, %v601
    %v932 = vmul.f32 %v444, %v605
    %v933 = vmul.f32 %v446, %v607
    %v934 = vmul.f32 %v450, %v611
    %v935 = vmul.f32 %v452, %v613
    %v936 = vadd.f32 %v872, %v904
    %v937 = vadd.f32 %v873, %v905
    %v938 = vadd.f32 %v874, %v906
    %v939 = vadd.f32 %v875, %v907
    %v940 = vadd.f32 %v876, %v908
    %v941 = vadd.f32 %v877, %v909
    %v942 = vadd.f32 %v878, %v910
    %v943 = vadd.f32 %v879, %v911
    %v944 = vadd.f32 %v880, %v912
    %v945 = vadd.f32 %v881, %v913
    %v946 = vadd.f32 %v882, %v914
    %v947 = vadd.f32 %v883, %v915
    %v948 = vadd.f32 %v884, %v916
    %v949 = vadd.f32 %v885, %v917
    %v950 = vadd.f32 %v886, %v918
    %v951 = vadd.f32 %v887, %v919
    %v952 = vadd.f32 %v888, %v920
    %v953 = vadd.f32 %v889, %v921
    %v954 = vadd.f32 %v890, %v922
    %v955 = vadd.f32 %v891, %v923
    %v956 = vadd.f32 %v892, %v924
    %v957 = vadd.f32 %v893, %v925
    %v958 = vadd.f32 %v894, %v926
    %v959 = vadd.f32 %v895, %v927
    %v960 = vadd.f32 %v896, %v928
    %v961 = vadd.f32 %v897, %v929
    %v962 = vadd.f32 %v898, %v930
    %v963 = vadd.f32 %v899, %v931
    %v964 = vadd.f32 %v900, %v932
    %v965 = vadd.f32 %v901, %v933
    %v966 = vadd.f32 %v902, %v934
    %v967 = vadd.f32 %v903, %v935
    %v968 = vadd.f32 %v840, %v842
    %v969 = vrot.slane %v968, 4
    %v970 = vadd.f32 %v968, %v969
    %v971 = vrot.slane %v970, 2
    %v972 = vadd.f32 %v970, %v971
    %v973 = vrot.slane %v972, 1
    %v974 = vadd.f32 %v972, %v973
    %v975 = vadd.f32 %v841, %v843
    %v976 = vrot.slane %v975, 4
    %v977 = vadd.f32 %v975, %v976
    %v978 = vrot.slane %v977, 2
    %v979 = vadd.f32 %v977, %v978
    %v980 = vrot.slane %v979, 1
    %v981 = vadd.f32 %v979, %v980
    %v982 = vadd.f32 %v844, %v846
    %v983 = vrot.slane %v982, 4
    %v984 = vadd.f32 %v982, %v983
    %v985 = vrot.slane %v984, 2
    %v986 = vadd.f32 %v984, %v985
    %v987 = vrot.slane %v986, 1
    %v988 = vadd.f32 %v986, %v987
    %v989 = vadd.f32 %v845, %v847
    %v990 = vrot.slane %v989, 4
    %v991 = vadd.f32 %v989, %v990
    %v992 = vrot.slane %v991, 2
    %v993 = vadd.f32 %v991, %v992
    %v994 = vrot.slane %v993, 1
    %v995 = vadd.f32 %v993, %v994
    %v996 = vadd.f32 %v848, %v850
    %v997 = vrot.slane %v996, 4
    %v998 = vadd.f32 %v996, %v997
    %v999 = vrot.slane %v998, 2
    %v1000 = vadd.f32 %v998, %v999
    %v1001 = vrot.slane %v1000, 1
    %v1002 = vadd.f32 %v1000, %v1001
    %v1003 = vadd.f32 %v849, %v851
    %v1004 = vrot.slane %v1003, 4
    %v1005 = vadd.f32 %v1003, %v1004
    %v1006 = vrot.slane %v1005, 2
    %v1007 = vadd.f32 %v1005, %v1006
    %v1008 = vrot.slane %v1007, 1
    %v1009 = vadd.f32 %v1007, %v1008
    %v1010 = vadd.f32 %v852, %v854
    %v1011 = vrot.slane %v1010, 4
    %v1012 = vadd.f32 %v1010, %v1011
    %v1013 = vrot.slane %v1012, 2
    %v1014 = vadd.f32 %v1012, %v1013
    %v1015 = vrot.slane %v1014, 1
    %v1016 = vadd.f32 %v1014, %v1015
    %v1017 = vadd.f32 %v853, %v855
    %v1018 = vrot.slane %v1017, 4
    %v1019 = vadd.f32 %v1017, %v1018
    %v1020 = vrot.slane %v1019, 2
    %v1021 = vadd.f32 %v1019, %v1020
    %v1022 = vrot.slane %v1021, 1
    %v1023 = vadd.f32 %v1021, %v1022
    %v1024 = vadd.f32 %v856, %v858
    %v1025 = vrot.slane %v1024, 4
    %v1026 = vadd.f32 %v1024, %v1025
    %v1027 = vrot.slane %v1026, 2
    %v1028 = vadd.f32 %v1026, %v1027
    %v1029 = vrot.slane %v1028, 1
    %v1030 = vadd.f32 %v1028, %v1029
    %v1031 = vadd.f32 %v857, %v859
    %v1032 = vrot.slane %v1031, 4
    %v1033 = vadd.f32 %v1031, %v1032
    %v1034 = vrot.slane %v1033, 2
    %v1035 = vadd.f32 %v1033, %v1034
    %v1036 = vrot.slane %v1035, 1
    %v1037 = vadd.f32 %v1035, %v1036
    %v1038 = vadd.f32 %v860, %v862
    %v1039 = vrot.slane %v1038, 4
    %v1040 = vadd.f32 %v1038, %v1039
    %v1041 = vrot.slane %v1040, 2
    %v1042 = vadd.f32 %v1040, %v1041
    %v1043 = vrot.slane %v1042, 1
    %v1044 = vadd.f32 %v1042, %v1043
    %v1045 = vadd.f32 %v861, %v863
    %v1046 = vrot.slane %v1045, 4
    %v1047 = vadd.f32 %v1045, %v1046
    %v1048 = vrot.slane %v1047, 2
    %v1049 = vadd.f32 %v1047, %v1048
    %v1050 = vrot.slane %v1049, 1
    %v1051 = vadd.f32 %v1049, %v1050
    %v1052 = vadd.f32 %v864, %v866
    %v1053 = vrot.slane %v1052, 4
    %v1054 = vadd.f32 %v1052, %v1053
    %v1055 = vrot.slane %v1054, 2
    %v1056 = vadd.f32 %v1054, %v1055
    %v1057 = vrot.slane %v1056, 1
    %v1058 = vadd.f32 %v1056, %v1057
    %v1059 = vadd.f32 %v865, %v867
    %v1060 = vrot.slane %v1059, 4
    %v1061 = vadd.f32 %v1059, %v1060
    %v1062 = vrot.slane %v1061, 2
    %v1063 = vadd.f32 %v1061, %v1062
    %v1064 = vrot.slane %v1063, 1
    %v1065 = vadd.f32 %v1063, %v1064
    %v1066 = vadd.f32 %v868, %v870
    %v1067 = vrot.slane %v1066, 4
    %v1068 = vadd.f32 %v1066, %v1067
    %v1069 = vrot.slane %v1068, 2
    %v1070 = vadd.f32 %v1068, %v1069
    %v1071 = vrot.slane %v1070, 1
    %v1072 = vadd.f32 %v1070, %v1071
    %v1073 = vadd.f32 %v869, %v871
    %v1074 = vrot.slane %v1073, 4
    %v1075 = vadd.f32 %v1073, %v1074
    %v1076 = vrot.slane %v1075, 2
    %v1077 = vadd.f32 %v1075, %v1076
    %v1078 = vrot.slane %v1077, 1
    %v1079 = vadd.f32 %v1077, %v1078
    %v1080 = vadd.f32 %v936, %v938
    %v1081 = vrot.slane %v1080, 4
    %v1082 = vadd.f32 %v1080, %v1081
    %v1083 = vrot.slane %v1082, 2
    %v1084 = vadd.f32 %v1082, %v1083
    %v1085 = vrot.slane %v1084, 1
    %v1086 = vadd.f32 %v1084, %v1085
    %v1087 = vadd.f32 %v937, %v939
    %v1088 = vrot.slane %v1087, 4
    %v1089 = vadd.f32 %v1087, %v1088
    %v1090 = vrot.slane %v1089, 2
    %v1091 = vadd.f32 %v1089, %v1090
    %v1092 = vrot.slane %v1091, 1
    %v1093 = vadd.f32 %v1091, %v1092
    %v1094 = vadd.f32 %v940, %v942
    %v1095 = vrot.slane %v1094, 4
    %v1096 = vadd.f32 %v1094, %v1095
    %v1097 = vrot.slane %v1096, 2
    %v1098 = vadd.f32 %v1096, %v1097
    %v1099 = vrot.slane %v1098, 1
    %v1100 = vadd.f32 %v1098, %v1099
    %v1101 = vadd.f32 %v941, %v943
    %v1102 = vrot.slane %v1101, 4
    %v1103 = vadd.f32 %v1101, %v1102
    %v1104 = vrot.slane %v1103, 2
    %v1105 = vadd.f32 %v1103, %v1104
    %v1106 = vrot.slane %v1105, 1
    %v1107 = vadd.f32 %v1105, %v1106
    %v1108 = vadd.f32 %v944, %v946
    %v1109 = vrot.slane %v1108, 4
    %v1110 = vadd.f32 %v1108, %v1109
    %v1111 = vrot.slane %v1110, 2
    %v1112 = vadd.f32 %v1110, %v1111
    %v1113 = vrot.slane %v1112, 1
    %v1114 = vadd.f32 %v1112, %v1113
    %v1115 = vadd.f32 %v945, %v947
    %v1116 = vrot.slane %v1115, 4
    %v1117 = vadd.f32 %v1115, %v1116
    %v1118 = vrot.slane %v1117, 2
    %v1119 = vadd.f32 %v1117, %v1118
    %v1120 = vrot.slane %v1119, 1
    %v1121 = vadd.f32 %v1119, %v1120
    %v1122 = vadd.f32 %v948, %v950
    %v1123 = vrot.slane %v1122, 4
    %v1124 = vadd.f32 %v1122, %v1123
    %v1125 = vrot.slane %v1124, 2
    %v1126 = vadd.f32 %v1124, %v1125
    %v1127 = vrot.slane %v1126, 1
    %v1128 = vadd.f32 %v1126, %v1127
    %v1129 = vadd.f32 %v949, %v951
    %v1130 = vrot.slane %v1129, 4
    %v1131 = vadd.f32 %v1129, %v1130
    %v1132 = vrot.slane %v1131, 2
    %v1133 = vadd.f32 %v1131, %v1132
    %v1134 = vrot.slane %v1133, 1
    %v1135 = vadd.f32 %v1133, %v1134
    %v1136 = vadd.f32 %v952, %v954
    %v1137 = vrot.slane %v1136, 4
    %v1138 = vadd.f32 %v1136, %v1137
    %v1139 = vrot.slane %v1138, 2
    %v1140 = vadd.f32 %v1138, %v1139
    %v1141 = vrot.slane %v1140, 1
    %v1142 = vadd.f32 %v1140, %v1141
    %v1143 = vadd.f32 %v953, %v955
    %v1144 = vrot.slane %v1143, 4
    %v1145 = vadd.f32 %v1143, %v1144
    %v1146 = vrot.slane %v1145, 2
    %v1147 = vadd.f32 %v1145, %v1146
    %v1148 = vrot.slane %v1147, 1
    %v1149 = vadd.f32 %v1147, %v1148
    %v1150 = vadd.f32 %v956, %v958
    %v1151 = vrot.slane %v1150, 4
    %v1152 = vadd.f32 %v1150, %v1151
    %v1153 = vrot.slane %v1152, 2
    %v1154 = vadd.f32 %v1152, %v1153
    %v1155 = vrot.slane %v1154, 1
    %v1156 = vadd.f32 %v1154, %v1155
    %v1157 = vadd.f32 %v957, %v959
    %v1158 = vrot.slane %v1157, 4
    %v1159 = vadd.f32 %v1157, %v1158
    %v1160 = vrot.slane %v1159, 2
    %v1161 = vadd.f32 %v1159, %v1160
    %v1162 = vrot.slane %v1161, 1
    %v1163 = vadd.f32 %v1161, %v1162
    %v1164 = vadd.f32 %v960, %v962
    %v1165 = vrot.slane %v1164, 4
    %v1166 = vadd.f32 %v1164, %v1165
    %v1167 = vrot.slane %v1166, 2
    %v1168 = vadd.f32 %v1166, %v1167
    %v1169 = vrot.slane %v1168, 1
    %v1170 = vadd.f32 %v1168, %v1169
    %v1171 = vadd.f32 %v961, %v963
    %v1172 = vrot.slane %v1171, 4
    %v1173 = vadd.f32 %v1171, %v1172
    %v1174 = vrot.slane %v1173, 2
    %v1175 = vadd.f32 %v1173, %v1174
    %v1176 = vrot.slane %v1175, 1
    %v1177 = vadd.f32 %v1175, %v1176
    %v1178 = vadd.f32 %v964, %v966
    %v1179 = vrot.slane %v1178, 4
    %v1180 = vadd.f32 %v1178, %v1179
    %v1181 = vrot.slane %v1180, 2
    %v1182 = vadd.f32 %v1180, %v1181
    %v1183 = vrot.slane %v1182, 1
    %v1184 = vadd.f32 %v1182, %v1183
    %v1185 = vadd.f32 %v965, %v967
    %v1186 = vrot.slane %v1185, 4
    %v1187 = vadd.f32 %v1185, %v1186
    %v1188 = vrot.slane %v1187, 2
    %v1189 = vadd.f32 %v1187, %v1188
    %v1190 = vrot.slane %v1189, 1
    %v1191 = vadd.f32 %v1189, %v1190
    %vm1208 = vcmask 1041409
    %v1209 = vsel %vm1208, %v988, %v974
    %vm1210 = vcmask 1042434
    %v1211 = vsel %vm1210, %v1002, %v1209
    %vm1212 = vcmask 1043459
    %v1213 = vsel %vm1212, %v1016, %v1211
    %vm1214 = vcmask 1044484
    %v1215 = vsel %vm1214, %v1030, %v1213
    %vm1216 = vcmask 1045509
    %v1217 = vsel %vm1216, %v1044, %v1215
    %vm1218 = vcmask 1046534
    %v1219 = vsel %vm1218, %v1058, %v1217
    %vm1220 = vcmask 1047559
    %v1221 = vsel %vm1220, %v1072, %v1219
    %v1222 = vsel %vm1208, %v995, %v981
    %v1223 = vsel %vm1210, %v1009, %v1222
    %v1224 = vsel %vm1212, %v1023, %v1223
    %v1225 = vsel %vm1214, %v1037, %v1224
    %v1226 = vsel %vm1216, %v1051, %v1225
    %v1227 = vsel %vm1218, %v1065, %v1226
    %v1228 = vsel %vm1220, %v1079, %v1227
    %v1247 = vsel %vm1208, %v1100, %v1086
    %v1248 = vsel %vm1210, %v1114, %v1247
    %v1249 = vsel %vm1212, %v1128, %v1248
    %v1250 = vsel %vm1214, %v1142, %v1249
    %v1251 = vsel %vm1216, %v1156, %v1250
    %v1252 = vsel %vm1218, %v1170, %v1251
    %v1253 = vsel %vm1220, %v1184, %v1252
    %v1254 = vsel %vm1208, %v1107, %v1093
    %v1255 = vsel %vm1210, %v1121, %v1254
    %v1256 = vsel %vm1212, %v1135, %v1255
    %v1257 = vsel %vm1214, %v1149, %v1256
    %v1258 = vsel %vm1216, %v1163, %v1257
    %v1259 = vsel %vm1218, %v1177, %v1258
    %v1260 = vsel %vm1220, %v1191, %v1259
    %v1263 = vld [vmem:[#allocation5] sm:$0xff]
    %v1264 = vld [vmem:[#allocation5 + $0x8] sm:$0xff]
    %v1265 = vld [vmem:[#allocation5 + $0x10] sm:$0xff]
    %v1266 = vld [vmem:[#allocation5 + $0x18] sm:$0xff]
    %v1267 = vld [vmem:[#allocation5 + $0x20] sm:$0xff]
    %v1268 = vld [vmem:[#allocation5 + $0x28] sm:$0xff]
    %v1269 = vld [vmem:[#allocation5 + $0x30] sm:$0xff]
    %v1270 = vld [vmem:[#allocation5 + $0x38] sm:$0xff]
    %v1271 = vld [vmem:[#allocation5 + $0x40] sm:$0xff]
    %v1272 = vld [vmem:[#allocation5 + $0x48] sm:$0xff]
    %v1273 = vld [vmem:[#allocation5 + $0x50] sm:$0xff]
    %v1274 = vld [vmem:[#allocation5 + $0x58] sm:$0xff]
    %v1275 = vld [vmem:[#allocation5 + $0x60] sm:$0xff]
    %v1276 = vld [vmem:[#allocation5 + $0x68] sm:$0xff]
    %v1277 = vld [vmem:[#allocation5 + $0x70] sm:$0xff]
    %v1278 = vld [vmem:[#allocation5 + $0x78] sm:$0xff]
    %v1279 = vld [vmem:[#allocation5 + $0x80] sm:$0xff]
    %v1280 = vld [vmem:[#allocation5 + $0x88] sm:$0xff]
    %v1281 = vld [vmem:[#allocation5 + $0x90] sm:$0xff]
    %v1282 = vld [vmem:[#allocation5 + $0x98] sm:$0xff]
    %v1283 = vld [vmem:[#allocation5 + $0xa0] sm:$0xff]
    %v1284 = vld [vmem:[#allocation5 + $0xa8] sm:$0xff]
    %v1285 = vld [vmem:[#allocation5 + $0xb0] sm:$0xff]
    %v1286 = vld [vmem:[#allocation5 + $0xb8] sm:$0xff]
    %v1287 = vld [vmem:[#allocation5 + $0xc0] sm:$0xff]
    %v1288 = vld [vmem:[#allocation5 + $0xc8] sm:$0xff]
    %v1289 = vld [vmem:[#allocation5 + $0xd0] sm:$0xff]
    %v1290 = vld [vmem:[#allocation5 + $0xd8] sm:$0xff]
    %v1291 = vld [vmem:[#allocation5 + $0xe0] sm:$0xff]
    %v1292 = vld [vmem:[#allocation5 + $0xe8] sm:$0xff]
    %v1293 = vld [vmem:[#allocation5 + $0xf0] sm:$0xff]
    %v1294 = vld [vmem:[#allocation5 + $0xf8] sm:$0xff]
    %v1295 = vld [vmem:[#allocation5 + $0x100] sm:$0xff]
    %v1296 = vld [vmem:[#allocation5 + $0x108] sm:$0xff]
    %v1297 = vld [vmem:[#allocation5 + $0x110] sm:$0xff]
    %v1298 = vld [vmem:[#allocation5 + $0x118] sm:$0xff]
    %v1299 = vld [vmem:[#allocation5 + $0x120] sm:$0xff]
    %v1300 = vld [vmem:[#allocation5 + $0x128] sm:$0xff]
    %v1301 = vld [vmem:[#allocation5 + $0x130] sm:$0xff]
    %v1302 = vld [vmem:[#allocation5 + $0x138] sm:$0xff]
    %v1303 = vld [vmem:[#allocation5 + $0x140] sm:$0xff]
    %v1304 = vld [vmem:[#allocation5 + $0x148] sm:$0xff]
    %v1305 = vld [vmem:[#allocation5 + $0x150] sm:$0xff]
    %v1306 = vld [vmem:[#allocation5 + $0x158] sm:$0xff]
    %v1307 = vld [vmem:[#allocation5 + $0x160] sm:$0xff]
    %v1308 = vld [vmem:[#allocation5 + $0x168] sm:$0xff]
    %v1309 = vld [vmem:[#allocation5 + $0x170] sm:$0xff]
    %v1310 = vld [vmem:[#allocation5 + $0x178] sm:$0xff]
    %v1311 = vld [vmem:[#allocation5 + $0x180] sm:$0xff]
    %v1312 = vld [vmem:[#allocation5 + $0x188] sm:$0xff]
    %v1313 = vld [vmem:[#allocation5 + $0x190] sm:$0xff]
    %v1314 = vld [vmem:[#allocation5 + $0x198] sm:$0xff]
    %v1315 = vld [vmem:[#allocation5 + $0x1a0] sm:$0xff]
    %v1316 = vld [vmem:[#allocation5 + $0x1a8] sm:$0xff]
    %v1317 = vld [vmem:[#allocation5 + $0x1b0] sm:$0xff]
    %v1318 = vld [vmem:[#allocation5 + $0x1b8] sm:$0xff]
    %v1319 = vld [vmem:[#allocation5 + $0x1c0] sm:$0xff]
    %v1320 = vld [vmem:[#allocation5 + $0x1c8] sm:$0xff]
    %v1321 = vld [vmem:[#allocation5 + $0x1d0] sm:$0xff]
    %v1322 = vld [vmem:[#allocation5 + $0x1d8] sm:$0xff]
    %v1323 = vld [vmem:[#allocation5 + $0x1e0] sm:$0xff]
    %v1324 = vld [vmem:[#allocation5 + $0x1e8] sm:$0xff]
    %v1325 = vld [vmem:[#allocation5 + $0x1f0] sm:$0xff]
    %v1326 = vld [vmem:[#allocation5 + $0x1f8] sm:$0xff]
    %v1327 = vld [vmem:[#allocation5 + $0x200] sm:$0xff]
    %v1328 = vld [vmem:[#allocation5 + $0x208] sm:$0xff]
    %v1329 = vld [vmem:[#allocation5 + $0x210] sm:$0xff]
    %v1330 = vld [vmem:[#allocation5 + $0x218] sm:$0xff]
    %v1331 = vld [vmem:[#allocation5 + $0x220] sm:$0xff]
    %v1332 = vld [vmem:[#allocation5 + $0x228] sm:$0xff]
    %v1333 = vld [vmem:[#allocation5 + $0x230] sm:$0xff]
    %v1334 = vld [vmem:[#allocation5 + $0x238] sm:$0xff]
    %v1335 = vld [vmem:[#allocation5 + $0x240] sm:$0xff]
    %v1336 = vld [vmem:[#allocation5 + $0x248] sm:$0xff]
    %v1337 = vld [vmem:[#allocation5 + $0x250] sm:$0xff]
    %v1338 = vld [vmem:[#allocation5 + $0x258] sm:$0xff]
    %v1339 = vld [vmem:[#allocation5 + $0x260] sm:$0xff]
    %v1340 = vld [vmem:[#allocation5 + $0x268] sm:$0xff]
    %v1341 = vld [vmem:[#allocation5 + $0x270] sm:$0xff]
    %v1342 = vld [vmem:[#allocation5 + $0x278] sm:$0xff]
    %v1343 = vld [vmem:[#allocation5 + $0x280] sm:$0xff]
    %v1344 = vld [vmem:[#allocation5 + $0x288] sm:$0xff]
    %v1345 = vld [vmem:[#allocation5 + $0x290] sm:$0xff]
    %v1346 = vld [vmem:[#allocation5 + $0x298] sm:$0xff]
    %v1347 = vld [vmem:[#allocation5 + $0x2a0] sm:$0xff]
    %v1348 = vld [vmem:[#allocation5 + $0x2a8] sm:$0xff]
    %v1349 = vld [vmem:[#allocation5 + $0x2b0] sm:$0xff]
    %v1350 = vld [vmem:[#allocation5 + $0x2b8] sm:$0xff]
    %v1351 = vld [vmem:[#allocation5 + $0x2c0] sm:$0xff]
    %v1352 = vld [vmem:[#allocation5 + $0x2c8] sm:$0xff]
    %v1353 = vld [vmem:[#allocation5 + $0x2d0] sm:$0xff]
    %v1354 = vld [vmem:[#allocation5 + $0x2d8] sm:$0xff]
    %v1355 = vld [vmem:[#allocation5 + $0x2e0] sm:$0xff]
    %v1356 = vld [vmem:[#allocation5 + $0x2e8] sm:$0xff]
    %v1357 = vld [vmem:[#allocation5 + $0x2f0] sm:$0xff]
    %v1358 = vld [vmem:[#allocation5 + $0x2f8] sm:$0xff]
    %v1359 = vld [vmem:[#allocation5 + $0x300] sm:$0xff]
    %v1360 = vld [vmem:[#allocation5 + $0x308] sm:$0xff]
    %v1361 = vld [vmem:[#allocation5 + $0x310] sm:$0xff]
    %v1362 = vld [vmem:[#allocation5 + $0x318] sm:$0xff]
    %v1363 = vld [vmem:[#allocation5 + $0x320] sm:$0xff]
    %v1364 = vld [vmem:[#allocation5 + $0x328] sm:$0xff]
    %v1365 = vld [vmem:[#allocation5 + $0x330] sm:$0xff]
    %v1366 = vld [vmem:[#allocation5 + $0x338] sm:$0xff]
    %v1367 = vld [vmem:[#allocation5 + $0x340] sm:$0xff]
    %v1368 = vld [vmem:[#allocation5 + $0x348] sm:$0xff]
    %v1369 = vld [vmem:[#allocation5 + $0x350] sm:$0xff]
    %v1370 = vld [vmem:[#allocation5 + $0x358] sm:$0xff]
    %v1371 = vld [vmem:[#allocation5 + $0x360] sm:$0xff]
    %v1372 = vld [vmem:[#allocation5 + $0x368] sm:$0xff]
    %v1373 = vld [vmem:[#allocation5 + $0x370] sm:$0xff]
    %v1374 = vld [vmem:[#allocation5 + $0x378] sm:$0xff]
    %v1375 = vld [vmem:[#allocation5 + $0x380] sm:$0xff]
    %v1376 = vld [vmem:[#allocation5 + $0x388] sm:$0xff]
    %v1377 = vld [vmem:[#allocation5 + $0x390] sm:$0xff]
    %v1378 = vld [vmem:[#allocation5 + $0x398] sm:$0xff]
    %v1379 = vld [vmem:[#allocation5 + $0x3a0] sm:$0xff]
    %v1380 = vld [vmem:[#allocation5 + $0x3a8] sm:$0xff]
    %v1381 = vld [vmem:[#allocation5 + $0x3b0] sm:$0xff]
    %v1382 = vld [vmem:[#allocation5 + $0x3b8] sm:$0xff]
    %v1383 = vld [vmem:[#allocation5 + $0x3c0] sm:$0xff]
    %v1384 = vld [vmem:[#allocation5 + $0x3c8] sm:$0xff]
    %v1385 = vld [vmem:[#allocation5 + $0x3d0] sm:$0xff]
    %v1386 = vld [vmem:[#allocation5 + $0x3d8] sm:$0xff]
    %v1387 = vld [vmem:[#allocation5 + $0x3e0] sm:$0xff]
    %v1388 = vld [vmem:[#allocation5 + $0x3e8] sm:$0xff]
    %v1389 = vld [vmem:[#allocation5 + $0x3f0] sm:$0xff]
    %v1390 = vld [vmem:[#allocation5 + $0x3f8] sm:$0xff]
    %1391 = vmatprep.subr.mxu0 %v1264
    %1392 = vmatpush1.msra.mxu0 %v1263
    %1393 = vmatprep.subr.mxu0 %v1266
    %1394 = vmatpush1.msra.mxu0 %v1265
    %1395 = vmatprep.subr.mxu0 %v1268
    %1396 = vmatpush1.msra.mxu0 %v1267
    %1397 = vmatprep.subr.mxu0 %v1270
    %1398 = vmatpush1.msra.mxu0 %v1269
    %1399 = vmatprep.subr.mxu0 %v1272
    %1400 = vmatpush1.msra.mxu0 %v1271
    %1401 = vmatprep.subr.mxu0 %v1274
    %1402 = vmatpush1.msra.mxu0 %v1273
    %1403 = vmatprep.subr.mxu0 %v1276
    %1404 = vmatpush1.msra.mxu0 %v1275
    %1405 = vmatprep.subr.mxu0 %v1278
    %1406 = vmatpush1.msra.mxu0 %v1277
    %1407 = vmatprep.subr.mxu0 %v1280
    %1408 = vmatpush1.msra.mxu0 %v1279
    %1409 = vmatprep.subr.mxu0 %v1282
    %1410 = vmatpush1.msra.mxu0 %v1281
    %1411 = vmatprep.subr.mxu0 %v1284
    %1412 = vmatpush1.msra.mxu0 %v1283
    %1413 = vmatprep.subr.mxu0 %v1286
    %1414 = vmatpush1.msra.mxu0 %v1285
    %1415 = vmatprep.subr.mxu0 %v1288
    %1416 = vmatpush1.msra.mxu0 %v1287
    %1417 = vmatprep.subr.mxu0 %v1290
    %1418 = vmatpush1.msra.mxu0 %v1289
    %1419 = vmatprep.subr.mxu0 %v1292
    %1420 = vmatpush1.msra.mxu0 %v1291
    %1421 = vmatprep.subr.mxu0 %v1294
    %1422 = vmatpush1.msra.mxu0 %v1293
    %1423 = vmatprep.subr.mxu0 %v1296
    %1424 = vmatpush1.msra.mxu0 %v1295
    %1425 = vmatprep.subr.mxu0 %v1298
    %1426 = vmatpush1.msra.mxu0 %v1297
    %1427 = vmatprep.subr.mxu0 %v1300
    %1428 = vmatpush1.msra.mxu0 %v1299
    %1429 = vmatprep.subr.mxu0 %v1302
    %1430 = vmatpush1.msra.mxu0 %v1301
    %1431 = vmatprep.subr.mxu0 %v1304
    %1432 = vmatpush1.msra.mxu0 %v1303
    %1433 = vmatprep.subr.mxu0 %v1306
    %1434 = vmatpush1.msra.mxu0 %v1305
    %1435 = vmatprep.subr.mxu0 %v1308
    %1436 = vmatpush1.msra.mxu0 %v1307
    %1437 = vmatprep.subr.mxu0 %v1310
    %1438 = vmatpush1.msra.mxu0 %v1309
    %1439 = vmatprep.subr.mxu0 %v1312
    %1440 = vmatpush1.msra.mxu0 %v1311
    %1441 = vmatprep.subr.mxu0 %v1314
    %1442 = vmatpush1.msra.mxu0 %v1313
    %1443 = vmatprep.subr.mxu0 %v1316
    %1444 = vmatpush1.msra.mxu0 %v1315
    %1445 = vmatprep.subr.mxu0 %v1318
    %1446 = vmatpush1.msra.mxu0 %v1317
    %1447 = vmatprep.subr.mxu0 %v1320
    %1448 = vmatpush1.msra.mxu0 %v1319
    %1449 = vmatprep.subr.mxu0 %v1322
    %1450 = vmatpush1.msra.mxu0 %v1321
    %1451 = vmatprep.subr.mxu0 %v1324
    %1452 = vmatpush1.msra.mxu0 %v1323
    %1453 = vmatprep.subr.mxu0 %v1326
    %1454 = vmatpush1.msra.mxu0 %v1325
    %1455 = vmatprep.mubr.f32.mxu0 %v1228
    %1456 = vmatmul.mubr.f32.gmra.mrb[0].mxu0 %v1221
    %v1457 = vpop.f32.mrb[0].mxu0
    %v1458 = vadd.f32 0.0, %v1457
    %v1459 = vpop.f32.mrb[0].mxu0
    %v1460 = vadd.f32 0.0, %v1459
    %1461 = vdwg.mxu0
    %1462 = vmatprep.subr.mxu0 %v1328
    %1463 = vmatpush1.msra.mxu0 %v1327
    %1464 = vmatprep.subr.mxu0 %v1330
    %1465 = vmatpush1.msra.mxu0 %v1329
    %1466 = vmatprep.subr.mxu0 %v1332
    %1467 = vmatpush1.msra.mxu0 %v1331
    %1468 = vmatprep.subr.mxu0 %v1334
    %1469 = vmatpush1.msra.mxu0 %v1333
    %1470 = vmatprep.subr.mxu0 %v1336
    %1471 = vmatpush1.msra.mxu0 %v1335
    %1472 = vmatprep.subr.mxu0 %v1338
    %1473 = vmatpush1.msra.mxu0 %v1337
    %1474 = vmatprep.subr.mxu0 %v1340
    %1475 = vmatpush1.msra.mxu0 %v1339
    %1476 = vmatprep.subr.mxu0 %v1342
    %1477 = vmatpush1.msra.mxu0 %v1341
    %1478 = vmatprep.subr.mxu0 %v1344
    %1479 = vmatpush1.msra.mxu0 %v1343
    %1480 = vmatprep.subr.mxu0 %v1346
    %1481 = vmatpush1.msra.mxu0 %v1345
    %1482 = vmatprep.subr.mxu0 %v1348
    %1483 = vmatpush1.msra.mxu0 %v1347
    %1484 = vmatprep.subr.mxu0 %v1350
    %1485 = vmatpush1.msra.mxu0 %v1349
    %1486 = vmatprep.subr.mxu0 %v1352
    %1487 = vmatpush1.msra.mxu0 %v1351
    %1488 = vmatprep.subr.mxu0 %v1354
    %1489 = vmatpush1.msra.mxu0 %v1353
    %1490 = vmatprep.subr.mxu0 %v1356
    %1491 = vmatpush1.msra.mxu0 %v1355
    %1492 = vmatprep.subr.mxu0 %v1358
    %1493 = vmatpush1.msra.mxu0 %v1357
    %1494 = vmatprep.subr.mxu0 %v1360
    %1495 = vmatpush1.msra.mxu0 %v1359
    %1496 = vmatprep.subr.mxu0 %v1362
    %1497 = vmatpush1.msra.mxu0 %v1361
    %1498 = vmatprep.subr.mxu0 %v1364
    %1499 = vmatpush1.msra.mxu0 %v1363
    %1500 = vmatprep.subr.mxu0 %v1366
    %1501 = vmatpush1.msra.mxu0 %v1365
    %1502 = vmatprep.subr.mxu0 %v1368
    %1503 = vmatpush1.msra.mxu0 %v1367
    %1504 = vmatprep.subr.mxu0 %v1370
    %1505 = vmatpush1.msra.mxu0 %v1369
    %1506 = vmatprep.subr.mxu0 %v1372
    %1507 = vmatpush1.msra.mxu0 %v1371
    %1508 = vmatprep.subr.mxu0 %v1374
    %1509 = vmatpush1.msra.mxu0 %v1373
    %1510 = vmatprep.subr.mxu0 %v1376
    %1511 = vmatpush1.msra.mxu0 %v1375
    %1512 = vmatprep.subr.mxu0 %v1378
    %1513 = vmatpush1.msra.mxu0 %v1377
    %1514 = vmatprep.subr.mxu0 %v1380
    %1515 = vmatpush1.msra.mxu0 %v1379
    %1516 = vmatprep.subr.mxu0 %v1382
    %1517 = vmatpush1.msra.mxu0 %v1381
    %1518 = vmatprep.subr.mxu0 %v1384
    %1519 = vmatpush1.msra.mxu0 %v1383
    %1520 = vmatprep.subr.mxu0 %v1386
    %1521 = vmatpush1.msra.mxu0 %v1385
    %1522 = vmatprep.subr.mxu0 %v1388
    %1523 = vmatpush1.msra.mxu0 %v1387
    %1524 = vmatprep.subr.mxu0 %v1390
    %1525 = vmatpush1.msra.mxu0 %v1389
    %1526 = vmatprep.mubr.f32.mxu0 %v1260
    %1527 = vmatmul.mubr.f32.gmra.mrb[0].mxu0 %v1253
    %v1528 = vpop.f32.mrb[0].mxu0
    %v1529 = vadd.f32 %v1458, %v1528
    %v1530 = vpop.f32.mrb[0].mxu0
    %v1531 = vadd.f32 %v1460, %v1530
    %1532 = vdwg.mxu0
    %1533 = vst [vmem:[#allocation7] sm:$0xff] %v1529
    %1534 = vst [vmem:[#allocation7 + $0x8] sm:$0xff] %v1531
    // Predicated region
    $region22: #{tpu_custom_call.1} parent=1 // pred_check
      _
    $region23: #{tpu_custom_call.1} parent=1 // pred_check_branch
      %1536 = sbr.rel (0) target = $region25
    $region24: #{tpu_custom_call.1} parent=1 // pred_region
      %s1538 = ssub.s32 256, 256
      %1539 = vsyncadd [#allocation4], %s1538
      %s1541 = sshll.u32 [#allocation7], 4
      %s1542 = int_to_ptr.vmem [resolvable:$true] %s1541
      %1544 = dma.vmem_to_hbm [thread:$0]  %s1542, 256, %s3, [#allocation4]
    $region25: #{tpu_custom_call.1} parent=1 // pred_fallthru
      _
    // Predicated region
    $region26: #{tpu_custom_call.1} parent=1 // pred_check
      _
    $region27: #{tpu_custom_call.1} parent=1 // pred_check_branch
      %1546 = sbr.rel (0) target = $region29
    $region28: #{tpu_custom_call.1} parent=1 // pred_region
      %1547 = dma.done [#allocation4], 256
    $region29: #{tpu_custom_call.1} parent=1 // pred_fallthru
      _
    %1548 = vsyncpa [#allocation3], 1
    %1549 = vsyncpa [#allocation6], 1
    %1550 = vsyncpa [#allocation4], 1

</llo_original>
